<compile_context>
chip_gen: v5e
topology: v5e:2x2
jax: 0.10.0
libtpu: 0.0.40
codegen_flags: <defaults>
</compile_context>

<pallas_src>
import functools

import jax
import jax.numpy as jnp
from jax import lax
from jax.experimental import pallas as pl
from jax.experimental.pallas import tpu as pltpu


def _round_up(x: int, m: int) -> int:
    return (x + m - 1) // m * m


def _ccassg_kernel(h1_ref, h2_ref, out_ref,
                   s11, s12, s22, cs1, cs2, q1, q2, x12, *,
                   lambd: float, emb_size: int, batch: int, d_true: int,
                   cast_bf16: bool):
    k = pl.program_id(0)

    @pl.when(k == 0)
    def _init():
        s11[...] = jnp.zeros_like(s11)
        s12[...] = jnp.zeros_like(s12)
        s22[...] = jnp.zeros_like(s22)
        cs1[...] = jnp.zeros_like(cs1)
        cs2[...] = jnp.zeros_like(cs2)
        q1[...] = jnp.zeros_like(q1)
        q2[...] = jnp.zeros_like(q2)
        x12[...] = jnp.zeros_like(x12)

    h1 = h1_ref[...]
    h2 = h2_ref[...]

    # Optional bf16 MXU path (opt-in; f32 accumulation preserved).
    if cast_bf16 and h1.dtype == jnp.float32:
        a1 = h1.astype(jnp.bfloat16)
        a2 = h2.astype(jnp.bfloat16)
    else:
        a1, a2 = h1, h2

    # Contract the batch (sublane) dim: S += h^T h.  Three (Dp, Dp) blocks,
    # no redundant S21 and no concatenated (TB, 2Dp) tile.
    dn = (((0,), (0,)), ((), ()))
    s11[...] += lax.dot_general(a1, a1, dn, preferred_element_type=jnp.float32)
    s12[...] += lax.dot_general(a1, a2, dn, preferred_element_type=jnp.float32)
    s22[...] += lax.dot_general(a2, a2, dn, preferred_element_type=jnp.float32)

    # Per-column raw moments (VPU/XLU work hides under the MXU pushes).
    h1f = h1.astype(jnp.float32)
    h2f = h2.astype(jnp.float32)
    cs1[...] += jnp.sum(h1f, axis=0, keepdims=True)
    cs2[...] += jnp.sum(h2f, axis=0, keepdims=True)
    q1[...] += jnp.sum(h1f * h1f, axis=0, keepdims=True)
    q2[...] += jnp.sum(h2f * h2f, axis=0, keepdims=True)
    x12[...] += jnp.sum(h1f * h2f, axis=0, keepdims=True)

    @pl.when(k == pl.num_programs(0) - 1)
    def _epilogue():
        d_pad = s11.shape[-1]
        b = jnp.float32(batch)
        bm1 = jnp.float32(batch - 1)
        inv_n = jnp.float32(1.0 / emb_size)
        inv_sqrt_n = jnp.float32(1.0 / float(emb_size) ** 0.5)
        inv_sqrt_b = jnp.float32(1.0 / float(batch) ** 0.5)

        lane = lax.broadcasted_iota(jnp.int32, (1, d_pad), 1)
        real = lane < d_true

        c1v = cs1[...]
        c2v = cs2[...]
        q1v = q1[...]
        q2v = q2[...]
        x12v = x12[...]

        # diag of the centered Grams (O(D) vector math, no eye masks).
        diag_g11 = q1v - c1v * c1v / b
        diag_g22 = q2v - c2v * c2v / b
        diag_g12 = x12v - c1v * c2v / b

        # Unbiased per-column 1/std; padded columns (exactly-zero variance)
        # masked to 0.  Real zero-variance columns give inf/NaN, same as torch.
        inv1 = jnp.where(real, lax.rsqrt(diag_g11 / bm1), jnp.float32(0.0))
        inv2 = jnp.where(real, lax.rsqrt(diag_g22 / bm1), jnp.float32(0.0))

        # loss_inv = -trace(c); traces of c1/c2 for the Frobenius expansion.
        loss_inv = -jnp.sum(diag_g12 * inv1 * inv2) * inv_n
        tr_c1 = jnp.sum(diag_g11 * inv1 * inv1) * inv_n
        tr_c2 = jnp.sum(diag_g22 * inv2 * inv2) * inv_n

        dn1 = (((0,), (0,)), ((), ()))

        def frob_sq(s_ref, csum, inv):
            # C = (S - outer(csum, csum)/B) * outer(inv, inv) / N
            #   = S * outer(a, a) - outer(m, m)
            a = inv * inv_sqrt_n                 # (1, Dp)
            m = csum * a * inv_sqrt_b            # (1, Dp)
            outer_a = lax.dot_general(a, a, dn1,
                                      preferred_element_type=jnp.float32)
            outer_m = lax.dot_general(m, m, dn1,
                                      preferred_element_type=jnp.float32)
            c = s_ref[...] * outer_a - outer_m
            return jnp.sum(c * c)

        # ||I - c||_F^2 = sum(c^2) - 2*tr(c) + D
        loss_dec1 = frob_sq(s11, c1v, inv1) - 2.0 * tr_c1 + jnp.float32(d_true)
        loss_dec2 = frob_sq(s22, c2v, inv2) - 2.0 * tr_c2 + jnp.float32(d_true)

        out_ref[0] = loss_inv + jnp.float32(lambd) * (loss_dec1 + loss_dec2)


def ccassg_loss(h1: jax.Array, h2: jax.Array, *, lambd: float, emb_size: int,
                block_b: int | None = None,
                use_bf16_matmul: bool = False) -> jax.Array:
    """Pallas TPU implementation of CCASSGLoss.forward. Returns a scalar f32."""
    assert h1.shape == h2.shape and h1.ndim == 2
    B, D = h1.shape
    assert B >= 2, "unbiased std needs at least 2 samples (matches torch)"

    itemsize = jnp.dtype(h1.dtype).itemsize
    row_mult = max(8, 32 // max(1, itemsize))      # 8 for f32, 16 for bf16
    d_pad = _round_up(D, 128)

    # Per-generation VMEM budget (v5e/v6e: 128 MiB, v7x: 64 MiB per TC).
    try:
        cap = int(pltpu.get_tpu_info().vmem_capacity_bytes)
    except Exception:
        cap = 64 * 1024 * 1024                     # conservative default
    budget = cap - max(8 << 20, cap // 8)          # leave headroom

    acc_bytes = 3 * d_pad * d_pad * 4 + 5 * 8 * d_pad * 4   # Grams + vectors
    epi_bytes = 3 * d_pad * d_pad * 4                        # epilogue temps
    if acc_bytes + epi_bytes > budget:
        raise ValueError(
            f"emb dim {D} (padded {d_pad}) needs ~{(acc_bytes + epi_bytes) >> 20} MiB "
            f"of VMEM accumulators, exceeding the ~{budget >> 20} MiB budget; "
            "a D-tiled Gram variant is required for this size.")

    # block_b scales with d_pad: target ~2 MiB per input tile, clamped.
    if block_b is None:
        tgt_rows = (2 << 20) // max(1, d_pad * itemsize)
        block_b = int(min(2048, max(row_mult, tgt_rows)))
    block_b = _round_up(int(block_b), row_mult)
    block_b = min(block_b, _round_up(B, row_mult))

    # Bound the pipelined input tiles by the remaining VMEM budget
    # (2 inputs x 2 double-buffers).
    in_budget = budget - (acc_bytes + epi_bytes)
    max_rows = in_budget // (2 * 2 * d_pad * itemsize)
    max_rows = max(row_mult, (max_rows // row_mult) * row_mult)
    block_b = max(row_mult, min(block_b, max_rows))

    b_pad = _round_up(B, block_b)
    num_tiles = b_pad // block_b

    # Zero padding: zero rows change none of the accumulators (B in the
    # formulas is the true B); zero columns are masked in-kernel.
    h1p = jnp.pad(h1, ((0, b_pad - B), (0, d_pad - D)))
    h2p = jnp.pad(h2, ((0, b_pad - B), (0, d_pad - D)))

    kernel = functools.partial(
        _ccassg_kernel, lambd=float(lambd), emb_size=int(emb_size),
        batch=int(B), d_true=int(D), cast_bf16=bool(use_bf16_matmul))

    est = (2 * 2 * block_b * d_pad * itemsize + acc_bytes + epi_bytes
           + (4 << 20))
    vmem_limit = int(min(budget, max(16 << 20, est)))

    out = pl.pallas_call(
        kernel,
        out_shape=jax.ShapeDtypeStruct((1,), jnp.float32),
        grid_spec=pltpu.PrefetchScalarGridSpec(
            num_scalar_prefetch=0,
            grid=(num_tiles,),
            in_specs=[
                pl.BlockSpec((block_b, d_pad), lambda i: (i, 0)),
                pl.BlockSpec((block_b, d_pad), lambda i: (i, 0)),
            ],
            out_specs=pl.BlockSpec(memory_space=pltpu.MemorySpace.SMEM),
            scratch_shapes=[
                pltpu.VMEM((d_pad, d_pad), jnp.float32),   # S11
                pltpu.VMEM((d_pad, d_pad), jnp.float32),   # S12
                pltpu.VMEM((d_pad, d_pad), jnp.float32),   # S22
                pltpu.VMEM((1, d_pad), jnp.float32),       # colsum h1
                pltpu.VMEM((1, d_pad), jnp.float32),       # colsum h2
                pltpu.VMEM((1, d_pad), jnp.float32),       # colsum h1^2
                pltpu.VMEM((1, d_pad), jnp.float32),       # colsum h2^2
                pltpu.VMEM((1, d_pad), jnp.float32),       # colsum h1*h2
            ],
        ),
        compiler_params=pltpu.CompilerParams(
            dimension_semantics=("arbitrary",),   # reduction into accumulators
            vmem_limit_bytes=vmem_limit,
        ),
    )(h1p, h2p)
    return out[0]


def _reference_loss(h1, h2, lambd, emb_size):
    # Pure-JAX reference mirroring the PyTorch forward.
    def std(h):  # unbiased, ddof=1 (torch default)
        return jnp.sqrt(jnp.sum((h - h.mean(0)) ** 2, axis=0) / (h.shape[0] - 1))

    z1 = (h1 - h1.mean(0)) / std(h1)
    z2 = (h2 - h2.mean(0)) / std(h2)
    c = (z1.T @ z2) / emb_size
    c1 = (z1.T @ z1) / emb_size
    c2 = (z2.T @ z2) / emb_size
    iden = jnp.eye(c.shape[0], dtype=z1.dtype)
    loss_inv = -jnp.trace(c)
    loss_dec1 = jnp.sum((iden - c1) ** 2)
    loss_dec2 = jnp.sum((iden - c2) ** 2)
    return loss_inv + lambd * (loss_dec1 + loss_dec2)


if __name__ == "__main__":
    # Small shapes consistent with the module: B samples, D-dim embeddings.
    B, D = 16, 32
    lambd = 0.5
    emb_size = D  # the module is constructed with emb_size

    key = jax.random.PRNGKey(0)
    k1, k2 = jax.random.split(key)
    h1 = jax.random.normal(k1, (B, D), dtype=jnp.float32)
    h2 = jax.random.normal(k2, (B, D), dtype=jnp.float32)

    # block_b=8 -> grid of 2 steps, exercising init / accumulate / epilogue.
    loss = ccassg_loss(h1, h2, lambd=lambd, emb_size=emb_size, block_b=8)
    loss = jax.block_until_ready(loss)

    ref = _reference_loss(h1, h2, lambd, emb_size)
    assert jnp.allclose(loss, ref, rtol=1e-3, atol=1e-3), (loss, ref)

    print("KERNEL_OK")
</pallas_src>

<mosaic_0001>
module attributes {stable_mosaic.version = 11 : i64} {
  func.func @_ccassg_kernel(%arg0: i32, %arg1: memref<8x128xf32, #tpu.memory_space<vmem>>, %arg2: memref<8x128xf32, #tpu.memory_space<vmem>>, %arg3: memref<1xf32, #tpu.memory_space<smem>>, %arg4: memref<128x128xf32, #tpu.memory_space<vmem>>, %arg5: memref<128x128xf32, #tpu.memory_space<vmem>>, %arg6: memref<128x128xf32, #tpu.memory_space<vmem>>, %arg7: memref<1x128xf32, #tpu.memory_space<vmem>>, %arg8: memref<1x128xf32, #tpu.memory_space<vmem>>, %arg9: memref<1x128xf32, #tpu.memory_space<vmem>>, %arg10: memref<1x128xf32, #tpu.memory_space<vmem>>, %arg11: memref<1x128xf32, #tpu.memory_space<vmem>>) attributes {dimension_semantics = [#tpu.dimension_semantics<arbitrary>], iteration_bounds = array<i64: 2>, scalar_prefetch = 0 : i64, scratch_operands = 8 : i64, tpu.core_type = #tpu.core_type<tc>, window_params = [{transform_indices = @transform_0, window_bounds = array<i64: 8, 128>}, {transform_indices = @transform_1, window_bounds = array<i64: 8, 128>}, {transform_indices = @transform_2, window_bounds = array<i64: 1>}]} {
    %c0_i32 = arith.constant 0 : i32
    %0 = arith.cmpi eq, %arg0, %c0_i32 : i32
    %1 = arith.extui %0 : i1 to i32
    %c0_i32_0 = arith.constant 0 : i32
    %2 = arith.cmpi ne, %1, %c0_i32_0 : i32
    scf.if %2 {
      %cst_44 = arith.constant 0.000000e+00 : f32
      %48 = vector.broadcast %cst_44 : f32 to vector<128x128xf32>
      %c0_45 = arith.constant 0 : index
      %c0_46 = arith.constant 0 : index
      %49 = vector.load %arg4[%c0_45, %c0_46] : memref<128x128xf32, #tpu.memory_space<vmem>>, vector<128x128xf32>
      tpu.vector_store %arg4[%c0_45, %c0_46], %48 {strides = array<i32>} : memref<128x128xf32, #tpu.memory_space<vmem>>, vector<128x128xf32>,
      %cst_47 = arith.constant 0.000000e+00 : f32
      %50 = vector.broadcast %cst_47 : f32 to vector<128x128xf32>
      %c0_48 = arith.constant 0 : index
      %c0_49 = arith.constant 0 : index
      %51 = vector.load %arg5[%c0_48, %c0_49] : memref<128x128xf32, #tpu.memory_space<vmem>>, vector<128x128xf32>
      tpu.vector_store %arg5[%c0_48, %c0_49], %50 {strides = array<i32>} : memref<128x128xf32, #tpu.memory_space<vmem>>, vector<128x128xf32>,
      %cst_50 = arith.constant 0.000000e+00 : f32
      %52 = vector.broadcast %cst_50 : f32 to vector<128x128xf32>
      %c0_51 = arith.constant 0 : index
      %c0_52 = arith.constant 0 : index
      %53 = vector.load %arg6[%c0_51, %c0_52] : memref<128x128xf32, #tpu.memory_space<vmem>>, vector<128x128xf32>
      tpu.vector_store %arg6[%c0_51, %c0_52], %52 {strides = array<i32>} : memref<128x128xf32, #tpu.memory_space<vmem>>, vector<128x128xf32>,
      %cst_53 = arith.constant 0.000000e+00 : f32
      %54 = vector.broadcast %cst_53 : f32 to vector<1x128xf32>
      %c0_54 = arith.constant 0 : index
      %c0_55 = arith.constant 0 : index
      %55 = vector.load %arg7[%c0_54, %c0_55] : memref<1x128xf32, #tpu.memory_space<vmem>>, vector<1x128xf32>
      tpu.vector_store %arg7[%c0_54, %c0_55], %54 {strides = array<i32>} : memref<1x128xf32, #tpu.memory_space<vmem>>, vector<1x128xf32>,
      %cst_56 = arith.constant 0.000000e+00 : f32
      %56 = vector.broadcast %cst_56 : f32 to vector<1x128xf32>
      %c0_57 = arith.constant 0 : index
      %c0_58 = arith.constant 0 : index
      %57 = vector.load %arg8[%c0_57, %c0_58] : memref<1x128xf32, #tpu.memory_space<vmem>>, vector<1x128xf32>
      tpu.vector_store %arg8[%c0_57, %c0_58], %56 {strides = array<i32>} : memref<1x128xf32, #tpu.memory_space<vmem>>, vector<1x128xf32>,
      %cst_59 = arith.constant 0.000000e+00 : f32
      %58 = vector.broadcast %cst_59 : f32 to vector<1x128xf32>
      %c0_60 = arith.constant 0 : index
      %c0_61 = arith.constant 0 : index
      %59 = vector.load %arg9[%c0_60, %c0_61] : memref<1x128xf32, #tpu.memory_space<vmem>>, vector<1x128xf32>
      tpu.vector_store %arg9[%c0_60, %c0_61], %58 {strides = array<i32>} : memref<1x128xf32, #tpu.memory_space<vmem>>, vector<1x128xf32>,
      %cst_62 = arith.constant 0.000000e+00 : f32
      %60 = vector.broadcast %cst_62 : f32 to vector<1x128xf32>
      %c0_63 = arith.constant 0 : index
      %c0_64 = arith.constant 0 : index
      %61 = vector.load %arg10[%c0_63, %c0_64] : memref<1x128xf32, #tpu.memory_space<vmem>>, vector<1x128xf32>
      tpu.vector_store %arg10[%c0_63, %c0_64], %60 {strides = array<i32>} : memref<1x128xf32, #tpu.memory_space<vmem>>, vector<1x128xf32>,
      %cst_65 = arith.constant 0.000000e+00 : f32
      %62 = vector.broadcast %cst_65 : f32 to vector<1x128xf32>
      %c0_66 = arith.constant 0 : index
      %c0_67 = arith.constant 0 : index
      %63 = vector.load %arg11[%c0_66, %c0_67] : memref<1x128xf32, #tpu.memory_space<vmem>>, vector<1x128xf32>
      tpu.vector_store %arg11[%c0_66, %c0_67], %62 {strides = array<i32>} : memref<1x128xf32, #tpu.memory_space<vmem>>, vector<1x128xf32>,
    } else {
    }
    %c0 = arith.constant 0 : index
    %c0_1 = arith.constant 0 : index
    %3 = vector.load %arg1[%c0, %c0_1] : memref<8x128xf32, #tpu.memory_space<vmem>>, vector<8x128xf32>
    %c0_2 = arith.constant 0 : index
    %c0_3 = arith.constant 0 : index
    %4 = vector.load %arg2[%c0_2, %c0_3] : memref<8x128xf32, #tpu.memory_space<vmem>>, vector<8x128xf32>
    %c0_4 = arith.constant 0 : index
    %c0_5 = arith.constant 0 : index
    %5 = vector.load %arg4[%c0_4, %c0_5] : memref<128x128xf32, #tpu.memory_space<vmem>>, vector<128x128xf32>
    %cst = arith.constant dense<0.000000e+00> : vector<128x128xf32>
    %6 = tpu.matmul %3, %3, %cst {dimension_numbers = #tpu.dot_dimension_numbers<[0], [0], [1], [1], [0, 1, 1, 1], [], []>} : vector<8x128xf32>, vector<8x128xf32>, vector<128x128xf32> -> vector<128x128xf32>
    %7 = arith.addf %5, %6 : vector<128x128xf32>
    %c0_6 = arith.constant 0 : index
    %c0_7 = arith.constant 0 : index
    %8 = vector.load %arg4[%c0_6, %c0_7] : memref<128x128xf32, #tpu.memory_space<vmem>>, vector<128x128xf32>
    tpu.vector_store %arg4[%c0_6, %c0_7], %7 {strides = array<i32>} : memref<128x128xf32, #tpu.memory_space<vmem>>, vector<128x128xf32>,
    %c0_8 = arith.constant 0 : index
    %c0_9 = arith.constant 0 : index
    %9 = vector.load %arg5[%c0_8, %c0_9] : memref<128x128xf32, #tpu.memory_space<vmem>>, vector<128x128xf32>
    %cst_10 = arith.constant dense<0.000000e+00> : vector<128x128xf32>
    %10 = tpu.matmul %3, %4, %cst_10 {dimension_numbers = #tpu.dot_dimension_numbers<[0], [0], [1], [1], [0, 1, 1, 1], [], []>} : vector<8x128xf32>, vector<8x128xf32>, vector<128x128xf32> -> vector<128x128xf32>
    %11 = arith.addf %9, %10 : vector<128x128xf32>
    %c0_11 = arith.constant 0 : index
    %c0_12 = arith.constant 0 : index
    %12 = vector.load %arg5[%c0_11, %c0_12] : memref<128x128xf32, #tpu.memory_space<vmem>>, vector<128x128xf32>
    tpu.vector_store %arg5[%c0_11, %c0_12], %11 {strides = array<i32>} : memref<128x128xf32, #tpu.memory_space<vmem>>, vector<128x128xf32>,
    %c0_13 = arith.constant 0 : index
    %c0_14 = arith.constant 0 : index
    %13 = vector.load %arg6[%c0_13, %c0_14] : memref<128x128xf32, #tpu.memory_space<vmem>>, vector<128x128xf32>
    %cst_15 = arith.constant dense<0.000000e+00> : vector<128x128xf32>
    %14 = tpu.matmul %4, %4, %cst_15 {dimension_numbers = #tpu.dot_dimension_numbers<[0], [0], [1], [1], [0, 1, 1, 1], [], []>} : vector<8x128xf32>, vector<8x128xf32>, vector<128x128xf32> -> vector<128x128xf32>
    %15 = arith.addf %13, %14 : vector<128x128xf32>
    %c0_16 = arith.constant 0 : index
    %c0_17 = arith.constant 0 : index
    %16 = vector.load %arg6[%c0_16, %c0_17] : memref<128x128xf32, #tpu.memory_space<vmem>>, vector<128x128xf32>
    tpu.vector_store %arg6[%c0_16, %c0_17], %15 {strides = array<i32>} : memref<128x128xf32, #tpu.memory_space<vmem>>, vector<128x128xf32>,
    %c0_18 = arith.constant 0 : index
    %c0_19 = arith.constant 0 : index
    %17 = vector.load %arg7[%c0_18, %c0_19] : memref<1x128xf32, #tpu.memory_space<vmem>>, vector<1x128xf32>
    %cst_20 = arith.constant dense<0.000000e+00> : vector<128xf32>
    %18 = vector.multi_reduction <add>, %3, %cst_20 [0] : vector<8x128xf32> to vector<128xf32>
    %19 = vector.shape_cast %18 : vector<128xf32> to vector<1x128xf32>
    %20 = arith.addf %17, %19 : vector<1x128xf32>
    %c0_21 = arith.constant 0 : index
    %c0_22 = arith.constant 0 : index
    %21 = vector.load %arg7[%c0_21, %c0_22] : memref<1x128xf32, #tpu.memory_space<vmem>>, vector<1x128xf32>
    tpu.vector_store %arg7[%c0_21, %c0_22], %20 {strides = array<i32>} : memref<1x128xf32, #tpu.memory_space<vmem>>, vector<1x128xf32>,
    %c0_23 = arith.constant 0 : index
    %c0_24 = arith.constant 0 : index
    %22 = vector.load %arg8[%c0_23, %c0_24] : memref<1x128xf32, #tpu.memory_space<vmem>>, vector<1x128xf32>
    %cst_25 = arith.constant dense<0.000000e+00> : vector<128xf32>
    %23 = vector.multi_reduction <add>, %4, %cst_25 [0] : vector<8x128xf32> to vector<128xf32>
    %24 = vector.shape_cast %23 : vector<128xf32> to vector<1x128xf32>
    %25 = arith.addf %22, %24 : vector<1x128xf32>
    %c0_26 = arith.constant 0 : index
    %c0_27 = arith.constant 0 : index
    %26 = vector.load %arg8[%c0_26, %c0_27] : memref<1x128xf32, #tpu.memory_space<vmem>>, vector<1x128xf32>
    tpu.vector_store %arg8[%c0_26, %c0_27], %25 {strides = array<i32>} : memref<1x128xf32, #tpu.memory_space<vmem>>, vector<1x128xf32>,
    %c0_28 = arith.constant 0 : index
    %c0_29 = arith.constant 0 : index
    %27 = vector.load %arg9[%c0_28, %c0_29] : memref<1x128xf32, #tpu.memory_space<vmem>>, vector<1x128xf32>
    %28 = arith.mulf %3, %3 : vector<8x128xf32>
    %cst_30 = arith.constant dense<0.000000e+00> : vector<128xf32>
    %29 = vector.multi_reduction <add>, %28, %cst_30 [0] : vector<8x128xf32> to vector<128xf32>
    %30 = vector.shape_cast %29 : vector<128xf32> to vector<1x128xf32>
    %31 = arith.addf %27, %30 : vector<1x128xf32>
    %c0_31 = arith.constant 0 : index
    %c0_32 = arith.constant 0 : index
    %32 = vector.load %arg9[%c0_31, %c0_32] : memref<1x128xf32, #tpu.memory_space<vmem>>, vector<1x128xf32>
    tpu.vector_store %arg9[%c0_31, %c0_32], %31 {strides = array<i32>} : memref<1x128xf32, #tpu.memory_space<vmem>>, vector<1x128xf32>,
    %c0_33 = arith.constant 0 : index
    %c0_34 = arith.constant 0 : index
    %33 = vector.load %arg10[%c0_33, %c0_34] : memref<1x128xf32, #tpu.memory_space<vmem>>, vector<1x128xf32>
    %34 = arith.mulf %4, %4 : vector<8x128xf32>
    %cst_35 = arith.constant dense<0.000000e+00> : vector<128xf32>
    %35 = vector.multi_reduction <add>, %34, %cst_35 [0] : vector<8x128xf32> to vector<128xf32>
    %36 = vector.shape_cast %35 : vector<128xf32> to vector<1x128xf32>
    %37 = arith.addf %33, %36 : vector<1x128xf32>
    %c0_36 = arith.constant 0 : index
    %c0_37 = arith.constant 0 : index
    %38 = vector.load %arg10[%c0_36, %c0_37] : memref<1x128xf32, #tpu.memory_space<vmem>>, vector<1x128xf32>
    tpu.vector_store %arg10[%c0_36, %c0_37], %37 {strides = array<i32>} : memref<1x128xf32, #tpu.memory_space<vmem>>, vector<1x128xf32>,
    %c0_38 = arith.constant 0 : index
    %c0_39 = arith.constant 0 : index
    %39 = vector.load %arg11[%c0_38, %c0_39] : memref<1x128xf32, #tpu.memory_space<vmem>>, vector<1x128xf32>
    %40 = arith.mulf %3, %4 : vector<8x128xf32>
    %cst_40 = arith.constant dense<0.000000e+00> : vector<128xf32>
    %41 = vector.multi_reduction <add>, %40, %cst_40 [0] : vector<8x128xf32> to vector<128xf32>
    %42 = vector.shape_cast %41 : vector<128xf32> to vector<1x128xf32>
    %43 = arith.addf %39, %42 : vector<1x128xf32>
    %c0_41 = arith.constant 0 : index
    %c0_42 = arith.constant 0 : index
    %44 = vector.load %arg11[%c0_41, %c0_42] : memref<1x128xf32, #tpu.memory_space<vmem>>, vector<1x128xf32>
    tpu.vector_store %arg11[%c0_41, %c0_42], %43 {strides = array<i32>} : memref<1x128xf32, #tpu.memory_space<vmem>>, vector<1x128xf32>,
    %c1_i32 = arith.constant 1 : i32
    %45 = arith.cmpi eq, %arg0, %c1_i32 : i32
    %46 = arith.extui %45 : i1 to i32
    %c0_i32_43 = arith.constant 0 : i32
    %47 = arith.cmpi ne, %46, %c0_i32_43 : i32
    scf.if %47 {
      %48 = tpu.iota {dimensions = array<i32: 1>} : vector<1x128xi32>
      %c32_i32 = arith.constant 32 : i32
      %49 = vector.broadcast %c32_i32 : i32 to vector<1x128xi32>
      %50 = arith.cmpi slt, %48, %49 : vector<1x128xi32>
      %c0_44 = arith.constant 0 : index
      %c0_45 = arith.constant 0 : index
      %51 = vector.load %arg7[%c0_44, %c0_45] : memref<1x128xf32, #tpu.memory_space<vmem>>, vector<1x128xf32>
      %c0_46 = arith.constant 0 : index
      %c0_47 = arith.constant 0 : index
      %52 = vector.load %arg8[%c0_46, %c0_47] : memref<1x128xf32, #tpu.memory_space<vmem>>, vector<1x128xf32>
      %c0_48 = arith.constant 0 : index
      %c0_49 = arith.constant 0 : index
      %53 = vector.load %arg9[%c0_48, %c0_49] : memref<1x128xf32, #tpu.memory_space<vmem>>, vector<1x128xf32>
      %c0_50 = arith.constant 0 : index
      %c0_51 = arith.constant 0 : index
      %54 = vector.load %arg10[%c0_50, %c0_51] : memref<1x128xf32, #tpu.memory_space<vmem>>, vector<1x128xf32>
      %c0_52 = arith.constant 0 : index
      %c0_53 = arith.constant 0 : index
      %55 = vector.load %arg11[%c0_52, %c0_53] : memref<1x128xf32, #tpu.memory_space<vmem>>, vector<1x128xf32>
      %56 = arith.mulf %51, %51 : vector<1x128xf32>
      %cst_54 = arith.constant 1.600000e+01 : f32
      %57 = vector.broadcast %cst_54 : f32 to vector<1x128xf32>
      %58 = arith.divf %56, %57 : vector<1x128xf32>
      %59 = arith.subf %53, %58 : vector<1x128xf32>
      %60 = arith.mulf %52, %52 : vector<1x128xf32>
      %cst_55 = arith.constant 1.600000e+01 : f32
      %61 = vector.broadcast %cst_55 : f32 to vector<1x128xf32>
      %62 = arith.divf %60, %61 : vector<1x128xf32>
      %63 = arith.subf %54, %62 : vector<1x128xf32>
      %64 = arith.mulf %51, %52 : vector<1x128xf32>
      %cst_56 = arith.constant 1.600000e+01 : f32
      %65 = vector.broadcast %cst_56 : f32 to vector<1x128xf32>
      %66 = arith.divf %64, %65 : vector<1x128xf32>
      %67 = arith.subf %55, %66 : vector<1x128xf32>
      %cst_57 = arith.constant 1.500000e+01 : f32
      %68 = vector.broadcast %cst_57 : f32 to vector<1x128xf32>
      %69 = arith.divf %59, %68 : vector<1x128xf32>
      %70 = math.rsqrt %69 : vector<1x128xf32>
      %cst_58 = arith.constant 0.000000e+00 : f32
      %71 = vector.broadcast %cst_58 : f32 to vector<1x128xf32>
      %72 = arith.select %50, %70, %71 : vector<1x128xi1>, vector<1x128xf32>
      %cst_59 = arith.constant 1.500000e+01 : f32
      %73 = vector.broadcast %cst_59 : f32 to vector<1x128xf32>
      %74 = arith.divf %63, %73 : vector<1x128xf32>
      %75 = math.rsqrt %74 : vector<1x128xf32>
      %cst_60 = arith.constant 0.000000e+00 : f32
      %76 = vector.broadcast %cst_60 : f32 to vector<1x128xf32>
      %77 = arith.select %50, %75, %76 : vector<1x128xi1>, vector<1x128xf32>
      %78 = arith.mulf %67, %72 : vector<1x128xf32>
      %79 = arith.mulf %78, %77 : vector<1x128xf32>
      %80 = vector.shape_cast %79 : vector<1x128xf32> to vector<1x1x128xf32>
      %cst_61 = arith.constant dense<0.000000e+00> : vector<1xf32>
      %81 = vector.multi_reduction <add>, %80, %cst_61 [1, 2] : vector<1x1x128xf32> to vector<1xf32>
      %82 = vector.shape_cast %81 : vector<1xf32> to vector<1x1x1xf32>
      %83 = vector.extract %82[0, 0, 0] : f32 from vector<1x1x1xf32>
      %cst_62 = arith.constant 0.000000e+00 : f32
      %84 = arith.subf %cst_62, %83 : f32
      %cst_63 = arith.constant 3.125000e-02 : f32
      %85 = arith.mulf %84, %cst_63 : f32
      %86 = arith.mulf %59, %72 : vector<1x128xf32>
      %87 = arith.mulf %86, %72 : vector<1x128xf32>
      %88 = vector.shape_cast %87 : vector<1x128xf32> to vector<1x1x128xf32>
      %cst_64 = arith.constant dense<0.000000e+00> : vector<1xf32>
      %89 = vector.multi_reduction <add>, %88, %cst_64 [1, 2] : vector<1x1x128xf32> to vector<1xf32>
      %90 = vector.shape_cast %89 : vector<1xf32> to vector<1x1x1xf32>
      %91 = vector.extract %90[0, 0, 0] : f32 from vector<1x1x1xf32>
      %cst_65 = arith.constant 3.125000e-02 : f32
      %92 = arith.mulf %91, %cst_65 : f32
      %93 = arith.mulf %63, %77 : vector<1x128xf32>
      %94 = arith.mulf %93, %77 : vector<1x128xf32>
      %95 = vector.shape_cast %94 : vector<1x128xf32> to vector<1x1x128xf32>
      %cst_66 = arith.constant dense<0.000000e+00> : vector<1xf32>
      %96 = vector.multi_reduction <add>, %95, %cst_66 [1, 2] : vector<1x1x128xf32> to vector<1xf32>
      %97 = vector.shape_cast %96 : vector<1xf32> to vector<1x1x1xf32>
      %98 = vector.extract %97[0, 0, 0] : f32 from vector<1x1x1xf32>
      %cst_67 = arith.constant 3.125000e-02 : f32
      %99 = arith.mulf %98, %cst_67 : f32
      %cst_68 = arith.constant 0.176776692 : f32
      %100 = vector.broadcast %cst_68 : f32 to vector<1x128xf32>
      %101 = arith.mulf %72, %100 : vector<1x128xf32>
      %102 = arith.mulf %51, %101 : vector<1x128xf32>
      %cst_69 = arith.constant 2.500000e-01 : f32
      %103 = vector.broadcast %cst_69 : f32 to vector<1x128xf32>
      %104 = arith.mulf %102, %103 : vector<1x128xf32>
      %cst_70 = arith.constant dense<0.000000e+00> : vector<128x128xf32>
      %105 = tpu.matmul %101, %101, %cst_70 {dimension_numbers = #tpu.dot_dimension_numbers<[0], [0], [1], [1], [0, 1, 1, 1], [], []>} : vector<1x128xf32>, vector<1x128xf32>, vector<128x128xf32> -> vector<128x128xf32>
      %cst_71 = arith.constant dense<0.000000e+00> : vector<128x128xf32>
      %106 = tpu.matmul %104, %104, %cst_71 {dimension_numbers = #tpu.dot_dimension_numbers<[0], [0], [1], [1], [0, 1, 1, 1], [], []>} : vector<1x128xf32>, vector<1x128xf32>, vector<128x128xf32> -> vector<128x128xf32>
      %c0_72 = arith.constant 0 : index
      %c0_73 = arith.constant 0 : index
      %107 = vector.load %arg4[%c0_72, %c0_73] : memref<128x128xf32, #tpu.memory_space<vmem>>, vector<128x128xf32>
      %108 = arith.mulf %107, %105 : vector<128x128xf32>
      %109 = arith.subf %108, %106 : vector<128x128xf32>
      %110 = arith.mulf %109, %109 : vector<128x128xf32>
      %111 = vector.shape_cast %110 : vector<128x128xf32> to vector<1x128x128xf32>
      %cst_74 = arith.constant dense<0.000000e+00> : vector<1xf32>
      %112 = vector.multi_reduction <add>, %111, %cst_74 [1, 2] : vector<1x128x128xf32> to vector<1xf32>
      %113 = vector.shape_cast %112 : vector<1xf32> to vector<1x1x1xf32>
      %114 = vector.extract %113[0, 0, 0] : f32 from vector<1x1x1xf32>
      %cst_75 = arith.constant 2.000000e+00 : f32
      %115 = arith.mulf %cst_75, %92 : f32
      %116 = arith.subf %114, %115 : f32
      %cst_76 = arith.constant 3.200000e+01 : f32
      %117 = arith.addf %116, %cst_76 : f32
      %cst_77 = arith.constant 0.176776692 : f32
      %118 = vector.broadcast %cst_77 : f32 to vector<1x128xf32>
      %119 = arith.mulf %77, %118 : vector<1x128xf32>
      %120 = arith.mulf %52, %119 : vector<1x128xf32>
      %cst_78 = arith.constant 2.500000e-01 : f32
      %121 = vector.broadcast %cst_78 : f32 to vector<1x128xf32>
      %122 = arith.mulf %120, %121 : vector<1x128xf32>
      %cst_79 = arith.constant dense<0.000000e+00> : vector<128x128xf32>
      %123 = tpu.matmul %119, %119, %cst_79 {dimension_numbers = #tpu.dot_dimension_numbers<[0], [0], [1], [1], [0, 1, 1, 1], [], []>} : vector<1x128xf32>, vector<1x128xf32>, vector<128x128xf32> -> vector<128x128xf32>
      %cst_80 = arith.constant dense<0.000000e+00> : vector<128x128xf32>
      %124 = tpu.matmul %122, %122, %cst_80 {dimension_numbers = #tpu.dot_dimension_numbers<[0], [0], [1], [1], [0, 1, 1, 1], [], []>} : vector<1x128xf32>, vector<1x128xf32>, vector<128x128xf32> -> vector<128x128xf32>
      %c0_81 = arith.constant 0 : index
      %c0_82 = arith.constant 0 : index
      %125 = vector.load %arg6[%c0_81, %c0_82] : memref<128x128xf32, #tpu.memory_space<vmem>>, vector<128x128xf32>
      %126 = arith.mulf %125, %123 : vector<128x128xf32>
      %127 = arith.subf %126, %124 : vector<128x128xf32>
      %128 = arith.mulf %127, %127 : vector<128x128xf32>
      %129 = vector.shape_cast %128 : vector<128x128xf32> to vector<1x128x128xf32>
      %cst_83 = arith.constant dense<0.000000e+00> : vector<1xf32>
      %130 = vector.multi_reduction <add>, %129, %cst_83 [1, 2] : vector<1x128x128xf32> to vector<1xf32>
      %131 = vector.shape_cast %130 : vector<1xf32> to vector<1x1x1xf32>
      %132 = vector.extract %131[0, 0, 0] : f32 from vector<1x1x1xf32>
      %cst_84 = arith.constant 2.000000e+00 : f32
      %133 = arith.mulf %cst_84, %99 : f32
      %134 = arith.subf %132, %133 : f32
      %cst_85 = arith.constant 3.200000e+01 : f32
      %135 = arith.addf %134, %cst_85 : f32
      %136 = arith.addf %117, %135 : f32
      %cst_86 = arith.constant 5.000000e-01 : f32
      %137 = arith.mulf %cst_86, %136 : f32
      %138 = arith.addf %85, %137 : f32
      %c0_87 = arith.constant 0 : index
      %139 = memref.load %arg3[%c0_87] : memref<1xf32, #tpu.memory_space<smem>>
      memref.store %138, %arg3[%c0_87] : memref<1xf32, #tpu.memory_space<smem>>
    } else {
    }
    return
  }
  func.func @transform_0(%arg0: i32) -> (i32, i32) {
    %c0_i32 = arith.constant 0 : i32
    %c0_i32_0 = arith.constant 0 : i32
    return %arg0, %c0_i32 : i32, i32
  }
  func.func @transform_1(%arg0: i32) -> (i32, i32) {
    %c0_i32 = arith.constant 0 : i32
    %c0_i32_0 = arith.constant 0 : i32
    return %arg0, %c0_i32 : i32, i32
  }
  func.func @transform_2(%arg0: i32) -> i32 {
    %c0_i32 = arith.constant 0 : i32
    %c0_i32_0 = arith.constant 0 : i32
    return %c0_i32 : i32
  }
}

</mosaic_0001>

<llo_original>
// kernel: tpu_custom_call.1
$region0: #{tpu_custom_call.1}
  #allocation0 [shape = 'u32[]', space=smem, size = 0x4, offset = 0x4, fixed_abs, tag = 'smem constant byte address 0x4 - core index']
  #allocation1 [shape = 'u32[72,128]{1,0:T(1,128)}', space=vmem, size = 0x9000, scoped, tag = 'internal scratch']
  #allocation2 [shape = 'f32[128,128]{1,0:T(8,128)}', space=vmem, size = 0x10000, scoped, tag = 'scratch operand']
  #allocation3 [shape = 'f32[128,128]{1,0:T(8,128)}', space=vmem, size = 0x10000, scoped, tag = 'scratch operand']
  #allocation4 [shape = 'f32[128,128]{1,0:T(8,128)}', space=vmem, size = 0x10000, scoped, tag = 'scratch operand']
  #allocation5 [shape = 'f32[1,128]{1,0:T(1,128)}', space=vmem, size = 0x200, scoped, tag = 'scratch operand']
  #allocation6 [shape = 'f32[1,128]{1,0:T(1,128)}', space=vmem, size = 0x200, scoped, tag = 'scratch operand']
  #allocation7 [shape = 'f32[1,128]{1,0:T(1,128)}', space=vmem, size = 0x200, scoped, tag = 'scratch operand']
  #allocation8 [shape = 'f32[1,128]{1,0:T(1,128)}', space=vmem, size = 0x200, scoped, tag = 'scratch operand']
  #allocation9 [shape = 'f32[1,128]{1,0:T(1,128)}', space=vmem, size = 0x200, scoped, tag = 'scratch operand']
  %s0 = inlined_call_operand.hbm [shape: f32[16,128], index: 0, kind: input, shape index: {}]
  %s1 = inlined_call_operand.hbm [shape: f32[16,128], index: 1, kind: input, shape index: {}]
  %s2 = inlined_call_operand.hbm [shape: f32[1], index: 2, kind: output, shape index: {}]
  %s3 = sld [smem:[#allocation0]]
  $region57: #{tpu_custom_call.1} parent=0
    _
  %s5 = ssub.s32 1, %s3
  %s6 = scalar_select 0, %s5, %s3
  $region1: #{tpu_custom_call.1} parent=0
    #allocation10 [shape = 'u8[8192]{0}', space=vmem, size = 0x2000, scoped, tag = 'input window, operand 0']
    #allocation11 [shape = 's32[2]{0}', space=sflag, size = 0x8, scoped, tag = 'scoped memory for tpu_custom_call.1']
    #allocation12 [shape = 's32[2]{0}', space=sflag, size = 0x8, scoped, tag = 'scoped memory for tpu_custom_call.1']
    #allocation13 [shape = 'u8[8192]{0}', space=vmem, size = 0x2000, scoped, tag = 'input window, operand 1']
    #allocation14 [shape = 's32[2]{0}', space=sflag, size = 0x8, scoped, tag = 'scoped memory for tpu_custom_call.1']
    #allocation15 [shape = 'u8[512]{0}', space=smem, size = 0x200, scoped, tag = 'output window, operand 0, single buffered']
    %7 = vsyncpa [#allocation11], 0
    %s8 = scalar_lea.sflag [#allocation11], 1
    %9 = vsyncpa %s8, 0
    %10 = vsyncpa [#allocation14], 0
    %s11 = scalar_lea.sflag [#allocation14], 1
    %12 = vsyncpa %s11, 0
    %13 = vsyncpa [#allocation12], 0
    loop: start=0, step=1, limit=4
    $region2: #{tpu_custom_call.1} parent=1 // loop_pre_header
      _
    $region3: #{tpu_custom_call.1} parent=1 // loop_header
      %s15 = sphi 0, %s19
      %p16 = scmp.ge.s32.totalorder %s15, 4
      %s25 = sphi 0, %s27
      %s28 = sphi 0, %s25
      %s29 = sphi 0, %s28
      %s45 = sphi 0, %s29
      %s51 = sphi 0, %s53
      %s54 = sphi 0, %s51
      %s55 = sphi 0, %s54
      %s71 = sphi 0, %s55
      %s75 = sphi 0, %s75
      %s77 = sphi 0, %s75
      %s78 = sphi 0, %s77
      %s92 = sphi 0, %s78
    $region4: #{tpu_custom_call.1} parent=1 // loop_header_branch
      %18 = sbr.rel (%p16) target = $region8
    $region5: #{tpu_custom_call.1} parent=1 // loop_body
      %s20 = ssub.s32 %s15, 1
      %s21 = ssub.s32 %s15, 2
      %s22 = sadd.s32 %s15, 1
      %s23 = ssub.s32 %s15, %s22
      %p24 = scmp.eq.s32.totalorder %s23, 0
      %s26 = sadd.s32 %s25, 1
      %s27 = scalar_select %p24, %s25, %s26
      %p30 = pneg %p24
      %p31 = scmp.eq.s32.totalorder %s15, 1
      %p32 = por %p30, %p31
      %p33 = scmp.ne.s32.totalorder %s25, %s28
      %p34 = scmp.eq.s32.totalorder %s15, 0
      %p35 = por %p33, %p34
      %p36 = scmp.ne.s32.totalorder %s25, %s28
      %p37 = scmp.eq.s32.totalorder %s20, 1
      %p38 = por %p36, %p37
      %p39 = scmp.ne.s32.totalorder %s28, %s29
      %p40 = scmp.eq.s32.totalorder %s20, 0
      %p41 = por %p39, %p40
      %p42 = scmp.ne.s32.totalorder %s28, %s29
      %p43 = scmp.eq.s32.totalorder %s21, 1
      %p44 = por %p42, %p43
      %p46 = scmp.ne.s32.totalorder %s29, %s45
      %p47 = scmp.eq.s32.totalorder %s21, 0
      %p48 = por %p46, %p47
      %s49 = ssub.s32 %s15, %s22
      %p50 = scmp.eq.s32.totalorder %s49, 0
      %s52 = sadd.s32 %s51, 1
      %s53 = scalar_select %p50, %s51, %s52
      %p56 = pneg %p50
      %p57 = scmp.eq.s32.totalorder %s15, 1
      %p58 = por %p56, %p57
      %p59 = scmp.ne.s32.totalorder %s51, %s54
      %p60 = scmp.eq.s32.totalorder %s15, 0
      %p61 = por %p59, %p60
      %p62 = scmp.ne.s32.totalorder %s51, %s54
      %p63 = scmp.eq.s32.totalorder %s20, 1
      %p64 = por %p62, %p63
      %p65 = scmp.ne.s32.totalorder %s54, %s55
      %p66 = scmp.eq.s32.totalorder %s20, 0
      %p67 = por %p65, %p66
      %p68 = scmp.ne.s32.totalorder %s54, %s55
      %p69 = scmp.eq.s32.totalorder %s21, 1
      %p70 = por %p68, %p69
      %p72 = scmp.ne.s32.totalorder %s55, %s71
      %p73 = scmp.eq.s32.totalorder %s21, 0
      %p74 = por %p72, %p73
      %s76 = sadd.s32 %s75, 1
      %p79 = scmp.eq.s32.totalorder %s15, 1
      %p80 = scmp.ne.s32.totalorder %s75, %s77
      %p81 = scmp.eq.s32.totalorder %s15, 0
      %p82 = por %p80, %p81
      %p83 = scmp.ne.s32.totalorder %s75, %s77
      %p84 = scmp.eq.s32.totalorder %s20, 1
      %p85 = por %p83, %p84
      %p86 = scmp.ne.s32.totalorder %s77, %s78
      %p87 = scmp.eq.s32.totalorder %s20, 0
      %p88 = por %p86, %p87
      %p89 = scmp.ne.s32.totalorder %s77, %s78
      %p90 = scmp.eq.s32.totalorder %s21, 1
      %p91 = por %p89, %p90
      %p93 = scmp.ne.s32.totalorder %s78, %s92
      %p94 = scmp.eq.s32.totalorder %s21, 0
      %p95 = por %p93, %p94
      %p96 = scmp.le.s32.totalorder 1, %s15
      %p97 = scmp.lt.s32.totalorder %s15, 3
      %p98 = pnand %p96, %p97
      %p99 = pneg %p98
      // Predicated region
      $region9: #{tpu_custom_call.1} parent=5 // pred_check
        _
      $region10: #{tpu_custom_call.1} parent=5 // pred_check_branch
        %101 = sbr.rel (%p98) target = $region12
      $region11: #{tpu_custom_call.1} parent=5 // pred_region
        %s102 = ssub.s32 %s15, 1
      $region12: #{tpu_custom_call.1} parent=5 // pred_fallthru
        _
      %p103 = scmp.lt.s32.totalorder %s15, 2
      // Predicated region
      $region13: #{tpu_custom_call.1} parent=5 // pred_check
        %p104 = pneg %p103
      $region14: #{tpu_custom_call.1} parent=5 // pred_check_branch
        %106 = sbr.rel (%p104) target = $region16
      $region15: #{tpu_custom_call.1} parent=5 // pred_region
        // Predicated region
        $region17: #{tpu_custom_call.1} parent=15 // pred_check
          %p107 = pneg %p35
        $region18: #{tpu_custom_call.1} parent=15 // pred_check_branch
          %109 = sbr.rel (%p107) target = $region20
        $region19: #{tpu_custom_call.1} parent=15 // pred_region
          %s110 = sand.u32 %s25, 1
          %s111 = scalar_lea.sflag [#allocation11], %s110
          %s112 = sand.u32 %s25, 1
          %s113 = smul.addr %s112, 8
          %s114 = scalar_lea.vmem [#allocation10], %s113
          %116 = vsyncadd %s111, 0
          %s117 = smul.addr %s15, 8
          %s118 = scalar_lea.hbm %s0, %s117
          %s120 = sshll.u32 %s118, 4
          %s121 = int_to_ptr.hbm [resolvable:$true] %s120
          %s122 = sshll.u32 %s114, 4
          %s123 = int_to_ptr.vmem [resolvable:$true] %s122
          %125 = dma.hbm_to_vmem [thread:$0]  %s121, 128, %s123, %s111
        $region20: #{tpu_custom_call.1} parent=15 // pred_fallthru
          _
        // Predicated region
        $region21: #{tpu_custom_call.1} parent=15 // pred_check
          %p126 = pneg %p61
        $region22: #{tpu_custom_call.1} parent=15 // pred_check_branch
          %128 = sbr.rel (%p126) target = $region24
        $region23: #{tpu_custom_call.1} parent=15 // pred_region
          %s129 = sand.u32 %s51, 1
          %s130 = scalar_lea.sflag [#allocation14], %s129
          %s131 = sand.u32 %s51, 1
          %s132 = smul.addr %s131, 8
          %s133 = scalar_lea.vmem [#allocation13], %s132
          %135 = vsyncadd %s130, 0
          %s136 = smul.addr %s15, 8
          %s137 = scalar_lea.hbm %s1, %s136
          %s139 = sshll.u32 %s137, 4
          %s140 = int_to_ptr.hbm [resolvable:$true] %s139
          %s141 = sshll.u32 %s133, 4
          %s142 = int_to_ptr.vmem [resolvable:$true] %s141
          %144 = dma.hbm_to_vmem [thread:$0]  %s140, 128, %s142, %s130
        $region24: #{tpu_custom_call.1} parent=15 // pred_fallthru
          _
      $region16: #{tpu_custom_call.1} parent=5 // pred_fallthru
        _
      %p145 = scmp.le.s32.totalorder 1, %s15
      %p146 = scmp.lt.s32.totalorder %s15, 3
      %p147 = pnand %p145, %p146
      %p148 = pneg %p147
      // Predicated region
      $region25: #{tpu_custom_call.1} parent=5 // pred_check
        _
      $region26: #{tpu_custom_call.1} parent=5 // pred_check_branch
        %150 = sbr.rel (%p147) target = $region28
      $region27: #{tpu_custom_call.1} parent=5 // pred_region
        %s151 = ssub.s32 %s15, 1
        %s152 = sand.u32 %s28, 1
        %s153 = scalar_lea.sflag [#allocation11], %s152
        %s154 = sand.u32 %s28, 1
        %s155 = smul.addr %s154, 8
        %s156 = scalar_lea.vmem [#allocation10], %s155
        // Predicated region
        $region29: #{tpu_custom_call.1} parent=27 // pred_check
          %p157 = pneg %p41
        $region30: #{tpu_custom_call.1} parent=27 // pred_check_branch
          %159 = sbr.rel (%p157) target = $region32
        $region31: #{tpu_custom_call.1} parent=27 // pred_region
          %161 = dma.done %s153, 128
        $region32: #{tpu_custom_call.1} parent=27 // pred_fallthru
          _
        %s162 = sand.u32 %s54, 1
        %s163 = scalar_lea.sflag [#allocation14], %s162
        %s164 = sand.u32 %s54, 1
        %s165 = smul.addr %s164, 8
        %s166 = scalar_lea.vmem [#allocation13], %s165
        // Predicated region
        $region33: #{tpu_custom_call.1} parent=27 // pred_check
          %p167 = pneg %p67
        $region34: #{tpu_custom_call.1} parent=27 // pred_check_branch
          %169 = sbr.rel (%p167) target = $region36
        $region35: #{tpu_custom_call.1} parent=27 // pred_region
          %171 = dma.done %s163, 128
        $region36: #{tpu_custom_call.1} parent=27 // pred_fallthru
          _
        %s172 = sand.u32 %s28, 1
        %s173 = scalar_lea.sflag [#allocation11], %s172
        %s174 = sand.u32 %s28, 1
        %s175 = smul.addr %s174, 8
        %s176 = scalar_lea.vmem [#allocation10], %s175
        %p177 = pneg %p41
        %p178 = pneg %p38
        %s179 = sand.u32 %s54, 1
        %s180 = scalar_lea.sflag [#allocation14], %s179
        %s181 = sand.u32 %s54, 1
        %s182 = smul.addr %s181, 8
        %s183 = scalar_lea.vmem [#allocation13], %s182
        %p184 = pneg %p67
        %p185 = pneg %p64
        %p186 = pneg %p88
        %p187 = pneg %p85
        %p188 = scmp.eq.s32.totalorder %s20, 0
        // Predicated region
        $region37: #{tpu_custom_call.1} parent=27 // pred_check
          %p189 = pneg %p188
        $region38: #{tpu_custom_call.1} parent=27 // pred_check_branch
          %191 = sbr.rel (%p189) target = $region40
        $region39: #{tpu_custom_call.1} parent=27 // pred_region
          %192 = vst [vmem:[#allocation2] sm:$0xff] 0.0
          %193 = vst [vmem:[#allocation2 + $0x8] sm:$0xff] 0.0
          %194 = vst [vmem:[#allocation2 + $0x10] sm:$0xff] 0.0
          %195 = vst [vmem:[#allocation2 + $0x18] sm:$0xff] 0.0
          %196 = vst [vmem:[#allocation2 + $0x20] sm:$0xff] 0.0
          %197 = vst [vmem:[#allocation2 + $0x28] sm:$0xff] 0.0
          %198 = vst [vmem:[#allocation2 + $0x30] sm:$0xff] 0.0
          %199 = vst [vmem:[#allocation2 + $0x38] sm:$0xff] 0.0
          %200 = vst [vmem:[#allocation2 + $0x40] sm:$0xff] 0.0
          %201 = vst [vmem:[#allocation2 + $0x48] sm:$0xff] 0.0
          %202 = vst [vmem:[#allocation2 + $0x50] sm:$0xff] 0.0
          %203 = vst [vmem:[#allocation2 + $0x58] sm:$0xff] 0.0
          %204 = vst [vmem:[#allocation2 + $0x60] sm:$0xff] 0.0
          %205 = vst [vmem:[#allocation2 + $0x68] sm:$0xff] 0.0
          %206 = vst [vmem:[#allocation2 + $0x70] sm:$0xff] 0.0
          %207 = vst [vmem:[#allocation2 + $0x78] sm:$0xff] 0.0
          %208 = vst [vmem:[#allocation3] sm:$0xff] 0.0
          %209 = vst [vmem:[#allocation3 + $0x8] sm:$0xff] 0.0
          %210 = vst [vmem:[#allocation3 + $0x10] sm:$0xff] 0.0
          %211 = vst [vmem:[#allocation3 + $0x18] sm:$0xff] 0.0
          %212 = vst [vmem:[#allocation3 + $0x20] sm:$0xff] 0.0
          %213 = vst [vmem:[#allocation3 + $0x28] sm:$0xff] 0.0
          %214 = vst [vmem:[#allocation3 + $0x30] sm:$0xff] 0.0
          %215 = vst [vmem:[#allocation3 + $0x38] sm:$0xff] 0.0
          %216 = vst [vmem:[#allocation3 + $0x40] sm:$0xff] 0.0
          %217 = vst [vmem:[#allocation3 + $0x48] sm:$0xff] 0.0
          %218 = vst [vmem:[#allocation3 + $0x50] sm:$0xff] 0.0
          %219 = vst [vmem:[#allocation3 + $0x58] sm:$0xff] 0.0
          %220 = vst [vmem:[#allocation3 + $0x60] sm:$0xff] 0.0
          %221 = vst [vmem:[#allocation3 + $0x68] sm:$0xff] 0.0
          %222 = vst [vmem:[#allocation3 + $0x70] sm:$0xff] 0.0
          %223 = vst [vmem:[#allocation3 + $0x78] sm:$0xff] 0.0
          %224 = vst [vmem:[#allocation4] sm:$0xff] 0.0
          %225 = vst [vmem:[#allocation4 + $0x8] sm:$0xff] 0.0
          %226 = vst [vmem:[#allocation4 + $0x10] sm:$0xff] 0.0
          %227 = vst [vmem:[#allocation4 + $0x18] sm:$0xff] 0.0
          %228 = vst [vmem:[#allocation4 + $0x20] sm:$0xff] 0.0
          %229 = vst [vmem:[#allocation4 + $0x28] sm:$0xff] 0.0
          %230 = vst [vmem:[#allocation4 + $0x30] sm:$0xff] 0.0
          %231 = vst [vmem:[#allocation4 + $0x38] sm:$0xff] 0.0
          %232 = vst [vmem:[#allocation4 + $0x40] sm:$0xff] 0.0
          %233 = vst [vmem:[#allocation4 + $0x48] sm:$0xff] 0.0
          %234 = vst [vmem:[#allocation4 + $0x50] sm:$0xff] 0.0
          %235 = vst [vmem:[#allocation4 + $0x58] sm:$0xff] 0.0
          %236 = vst [vmem:[#allocation4 + $0x60] sm:$0xff] 0.0
          %237 = vst [vmem:[#allocation4 + $0x68] sm:$0xff] 0.0
          %238 = vst [vmem:[#allocation4 + $0x70] sm:$0xff] 0.0
          %239 = vst [vmem:[#allocation4 + $0x78] sm:$0xff] 0.0
          %240 = vst [vmem:[#allocation5] sm:$0x1] 0.0
          %241 = vst [vmem:[#allocation6] sm:$0x1] 0.0
          %242 = vst [vmem:[#allocation7] sm:$0x1] 0.0
          %243 = vst [vmem:[#allocation8] sm:$0x1] 0.0
          %244 = vst [vmem:[#allocation9] sm:$0x1] 0.0
        $region40: #{tpu_custom_call.1} parent=27 // pred_fallthru
          _
        %v245 = vld [vmem:[%s156] sm:$0xff]
        %v246 = vld [vmem:[%s166] sm:$0xff]
        %v247 = vld [vmem:[#allocation2] sm:$0xff]
        %v248 = vld [vmem:[#allocation2 + $0x8] sm:$0xff]
        %v249 = vld [vmem:[#allocation2 + $0x10] sm:$0xff]
        %v250 = vld [vmem:[#allocation2 + $0x18] sm:$0xff]
        %v251 = vld [vmem:[#allocation2 + $0x20] sm:$0xff]
        %v252 = vld [vmem:[#allocation2 + $0x28] sm:$0xff]
        %v253 = vld [vmem:[#allocation2 + $0x30] sm:$0xff]
        %v254 = vld [vmem:[#allocation2 + $0x38] sm:$0xff]
        %v255 = vld [vmem:[#allocation2 + $0x40] sm:$0xff]
        %v256 = vld [vmem:[#allocation2 + $0x48] sm:$0xff]
        %v257 = vld [vmem:[#allocation2 + $0x50] sm:$0xff]
        %v258 = vld [vmem:[#allocation2 + $0x58] sm:$0xff]
        %v259 = vld [vmem:[#allocation2 + $0x60] sm:$0xff]
        %v260 = vld [vmem:[#allocation2 + $0x68] sm:$0xff]
        %v261 = vld [vmem:[#allocation2 + $0x70] sm:$0xff]
        %v262 = vld [vmem:[#allocation2 + $0x78] sm:$0xff]
        %263 = vxpose.xlu0.b32.start [1/16] %v245, 128
        %264 = vxpose.xlu0.b32.cont [2/16] 0.0, 128
        %265 = vxpose.xlu0.b32.cont [3/16] 0.0, 128
        %266 = vxpose.xlu0.b32.cont [4/16] 0.0, 128
        %267 = vxpose.xlu0.b32.cont [5/16] 0.0, 128
        %268 = vxpose.xlu0.b32.cont [6/16] 0.0, 128
        %269 = vxpose.xlu0.b32.cont [7/16] 0.0, 128
        %270 = vxpose.xlu0.b32.cont [8/16] 0.0, 128
        %271 = vxpose.xlu0.b32.cont [9/16] 0.0, 128
        %272 = vxpose.xlu0.b32.cont [10/16] 0.0, 128
        %273 = vxpose.xlu0.b32.cont [11/16] 0.0, 128
        %274 = vxpose.xlu0.b32.cont [12/16] 0.0, 128
        %275 = vxpose.xlu0.b32.cont [13/16] 0.0, 128
        %276 = vxpose.xlu0.b32.cont [14/16] 0.0, 128
        %277 = vxpose.xlu0.b32.cont [15/16] 0.0, 128
        %278 = vxpose.xlu0.b32.end [16/16] 0.0, 128
        %v279 = vpop.trf.xlu0
        %v280 = vpop.trf.xlu0
        %v281 = vpop.trf.xlu0
        %v282 = vpop.trf.xlu0
        %v283 = vpop.trf.xlu0
        %v284 = vpop.trf.xlu0
        %v285 = vpop.trf.xlu0
        %v286 = vpop.trf.xlu0
        %v287 = vpop.trf.xlu0
        %v288 = vpop.trf.xlu0
        %v289 = vpop.trf.xlu0
        %v290 = vpop.trf.xlu0
        %v291 = vpop.trf.xlu0
        %v292 = vpop.trf.xlu0
        %v293 = vpop.trf.xlu0
        %v294 = vpop.trf.xlu0
        %vm295 = vcmask 64512
        %v297 = vsel %vm295, %v279, 0
        %v300 = vsel %vm295, %v280, 0
        %v303 = vsel %vm295, %v281, 0
        %v306 = vsel %vm295, %v282, 0
        %v309 = vsel %vm295, %v283, 0
        %v312 = vsel %vm295, %v284, 0
        %v315 = vsel %vm295, %v285, 0
        %v318 = vsel %vm295, %v286, 0
        %v321 = vsel %vm295, %v287, 0
        %v324 = vsel %vm295, %v288, 0
        %v327 = vsel %vm295, %v289, 0
        %v330 = vsel %vm295, %v290, 0
        %v333 = vsel %vm295, %v291, 0
        %v336 = vsel %vm295, %v292, 0
        %v339 = vsel %vm295, %v293, 0
        %v342 = vsel %vm295, %v294, 0
        %344 = vmatpush.msra.mxu0 0.0
        %345 = vmatpush.msra.mxu0 0.0
        %346 = vmatpush.msra.mxu0 0.0
        %347 = vmatpush.msra.mxu0 0.0
        %348 = vmatpush.msra.mxu0 0.0
        %349 = vmatpush.msra.mxu0 0.0
        %350 = vmatpush.msra.mxu0 0.0
        %351 = vmatpush.msra.mxu0 0.0
        %352 = vmatpush.msra.mxu0 0.0
        %353 = vmatpush.msra.mxu0 0.0
        %354 = vmatpush.msra.mxu0 0.0
        %355 = vmatpush.msra.mxu0 0.0
        %356 = vmatpush.msra.mxu0 0.0
        %357 = vmatpush.msra.mxu0 0.0
        %358 = vmatpush.msra.mxu0 0.0
        %359 = vmatpush.msra.mxu0 %v245
        %360 = vmatmul.f32.gmra.mxu0 %v297
        %v361 = vpop.f32.mrf.mxu0
        %v362 = vadd.f32 0.0, %v361
        %363 = vmatmul.f32.gmra.mxu0 %v300
        %v364 = vpop.f32.mrf.mxu0
        %v365 = vadd.f32 0.0, %v364
        %366 = vmatmul.f32.gmra.mxu0 %v303
        %v367 = vpop.f32.mrf.mxu0
        %v368 = vadd.f32 0.0, %v367
        %369 = vmatmul.f32.gmra.mxu0 %v306
        %v370 = vpop.f32.mrf.mxu0
        %v371 = vadd.f32 0.0, %v370
        %372 = vmatmul.f32.gmra.mxu0 %v309
        %v373 = vpop.f32.mrf.mxu0
        %v374 = vadd.f32 0.0, %v373
        %375 = vmatmul.f32.gmra.mxu0 %v312
        %v376 = vpop.f32.mrf.mxu0
        %v377 = vadd.f32 0.0, %v376
        %378 = vmatmul.f32.gmra.mxu0 %v315
        %v379 = vpop.f32.mrf.mxu0
        %v380 = vadd.f32 0.0, %v379
        %381 = vmatmul.f32.gmra.mxu0 %v318
        %v382 = vpop.f32.mrf.mxu0
        %v383 = vadd.f32 0.0, %v382
        %384 = vmatmul.f32.gmra.mxu0 %v321
        %v385 = vpop.f32.mrf.mxu0
        %v386 = vadd.f32 0.0, %v385
        %387 = vmatmul.f32.gmra.mxu0 %v324
        %v388 = vpop.f32.mrf.mxu0
        %v389 = vadd.f32 0.0, %v388
        %390 = vmatmul.f32.gmra.mxu0 %v327
        %v391 = vpop.f32.mrf.mxu0
        %v392 = vadd.f32 0.0, %v391
        %393 = vmatmul.f32.gmra.mxu0 %v330
        %v394 = vpop.f32.mrf.mxu0
        %v395 = vadd.f32 0.0, %v394
        %396 = vmatmul.f32.gmra.mxu0 %v333
        %v397 = vpop.f32.mrf.mxu0
        %v398 = vadd.f32 0.0, %v397
        %399 = vmatmul.f32.gmra.mxu0 %v336
        %v400 = vpop.f32.mrf.mxu0
        %v401 = vadd.f32 0.0, %v400
        %402 = vmatmul.f32.gmra.mxu0 %v339
        %v403 = vpop.f32.mrf.mxu0
        %v404 = vadd.f32 0.0, %v403
        %405 = vmatmul.f32.gmra.mxu0 %v342
        %v406 = vpop.f32.mrf.mxu0
        %v407 = vadd.f32 0.0, %v406
        %408 = vdwg.mxu0
        %v409 = vadd.f32 %v247, %v362
        %v410 = vadd.f32 %v248, %v365
        %v411 = vadd.f32 %v249, %v368
        %v412 = vadd.f32 %v250, %v371
        %v413 = vadd.f32 %v251, %v374
        %v414 = vadd.f32 %v252, %v377
        %v415 = vadd.f32 %v253, %v380
        %v416 = vadd.f32 %v254, %v383
        %v417 = vadd.f32 %v255, %v386
        %v418 = vadd.f32 %v256, %v389
        %v419 = vadd.f32 %v257, %v392
        %v420 = vadd.f32 %v258, %v395
        %v421 = vadd.f32 %v259, %v398
        %v422 = vadd.f32 %v260, %v401
        %v423 = vadd.f32 %v261, %v404
        %v424 = vadd.f32 %v262, %v407
        %425 = vst [vmem:[#allocation2] sm:$0xff] %v409
        %426 = vst [vmem:[#allocation2 + $0x8] sm:$0xff] %v410
        %427 = vst [vmem:[#allocation2 + $0x10] sm:$0xff] %v411
        %428 = vst [vmem:[#allocation2 + $0x18] sm:$0xff] %v412
        %429 = vst [vmem:[#allocation2 + $0x20] sm:$0xff] %v413
        %430 = vst [vmem:[#allocation2 + $0x28] sm:$0xff] %v414
        %431 = vst [vmem:[#allocation2 + $0x30] sm:$0xff] %v415
        %432 = vst [vmem:[#allocation2 + $0x38] sm:$0xff] %v416
        %433 = vst [vmem:[#allocation2 + $0x40] sm:$0xff] %v417
        %434 = vst [vmem:[#allocation2 + $0x48] sm:$0xff] %v418
        %435 = vst [vmem:[#allocation2 + $0x50] sm:$0xff] %v419
        %436 = vst [vmem:[#allocation2 + $0x58] sm:$0xff] %v420
        %437 = vst [vmem:[#allocation2 + $0x60] sm:$0xff] %v421
        %438 = vst [vmem:[#allocation2 + $0x68] sm:$0xff] %v422
        %439 = vst [vmem:[#allocation2 + $0x70] sm:$0xff] %v423
        %440 = vst [vmem:[#allocation2 + $0x78] sm:$0xff] %v424
        %v441 = vld [vmem:[#allocation3] sm:$0xff]
        %v442 = vld [vmem:[#allocation3 + $0x8] sm:$0xff]
        %v443 = vld [vmem:[#allocation3 + $0x10] sm:$0xff]
        %v444 = vld [vmem:[#allocation3 + $0x18] sm:$0xff]
        %v445 = vld [vmem:[#allocation3 + $0x20] sm:$0xff]
        %v446 = vld [vmem:[#allocation3 + $0x28] sm:$0xff]
        %v447 = vld [vmem:[#allocation3 + $0x30] sm:$0xff]
        %v448 = vld [vmem:[#allocation3 + $0x38] sm:$0xff]
        %v449 = vld [vmem:[#allocation3 + $0x40] sm:$0xff]
        %v450 = vld [vmem:[#allocation3 + $0x48] sm:$0xff]
        %v451 = vld [vmem:[#allocation3 + $0x50] sm:$0xff]
        %v452 = vld [vmem:[#allocation3 + $0x58] sm:$0xff]
        %v453 = vld [vmem:[#allocation3 + $0x60] sm:$0xff]
        %v454 = vld [vmem:[#allocation3 + $0x68] sm:$0xff]
        %v455 = vld [vmem:[#allocation3 + $0x70] sm:$0xff]
        %v456 = vld [vmem:[#allocation3 + $0x78] sm:$0xff]
        %457 = vmatpush.msra.mxu0 0.0
        %458 = vmatpush.msra.mxu0 0.0
        %459 = vmatpush.msra.mxu0 0.0
        %460 = vmatpush.msra.mxu0 0.0
        %461 = vmatpush.msra.mxu0 0.0
        %462 = vmatpush.msra.mxu0 0.0
        %463 = vmatpush.msra.mxu0 0.0
        %464 = vmatpush.msra.mxu0 0.0
        %465 = vmatpush.msra.mxu0 0.0
        %466 = vmatpush.msra.mxu0 0.0
        %467 = vmatpush.msra.mxu0 0.0
        %468 = vmatpush.msra.mxu0 0.0
        %469 = vmatpush.msra.mxu0 0.0
        %470 = vmatpush.msra.mxu0 0.0
        %471 = vmatpush.msra.mxu0 0.0
        %472 = vmatpush.msra.mxu0 %v246
        %473 = vmatmul.f32.gmra.mxu0 %v297
        %v474 = vpop.f32.mrf.mxu0
        %v475 = vadd.f32 0.0, %v474
        %476 = vmatmul.f32.gmra.mxu0 %v300
        %v477 = vpop.f32.mrf.mxu0
        %v478 = vadd.f32 0.0, %v477
        %479 = vmatmul.f32.gmra.mxu0 %v303
        %v480 = vpop.f32.mrf.mxu0
        %v481 = vadd.f32 0.0, %v480
        %482 = vmatmul.f32.gmra.mxu0 %v306
        %v483 = vpop.f32.mrf.mxu0
        %v484 = vadd.f32 0.0, %v483
        %485 = vmatmul.f32.gmra.mxu0 %v309
        %v486 = vpop.f32.mrf.mxu0
        %v487 = vadd.f32 0.0, %v486
        %488 = vmatmul.f32.gmra.mxu0 %v312
        %v489 = vpop.f32.mrf.mxu0
        %v490 = vadd.f32 0.0, %v489
        %491 = vmatmul.f32.gmra.mxu0 %v315
        %v492 = vpop.f32.mrf.mxu0
        %v493 = vadd.f32 0.0, %v492
        %494 = vmatmul.f32.gmra.mxu0 %v318
        %v495 = vpop.f32.mrf.mxu0
        %v496 = vadd.f32 0.0, %v495
        %497 = vmatmul.f32.gmra.mxu0 %v321
        %v498 = vpop.f32.mrf.mxu0
        %v499 = vadd.f32 0.0, %v498
        %500 = vmatmul.f32.gmra.mxu0 %v324
        %v501 = vpop.f32.mrf.mxu0
        %v502 = vadd.f32 0.0, %v501
        %503 = vmatmul.f32.gmra.mxu0 %v327
        %v504 = vpop.f32.mrf.mxu0
        %v505 = vadd.f32 0.0, %v504
        %506 = vmatmul.f32.gmra.mxu0 %v330
        %v507 = vpop.f32.mrf.mxu0
        %v508 = vadd.f32 0.0, %v507
        %509 = vmatmul.f32.gmra.mxu0 %v333
        %v510 = vpop.f32.mrf.mxu0
        %v511 = vadd.f32 0.0, %v510
        %512 = vmatmul.f32.gmra.mxu0 %v336
        %v513 = vpop.f32.mrf.mxu0
        %v514 = vadd.f32 0.0, %v513
        %515 = vmatmul.f32.gmra.mxu0 %v339
        %v516 = vpop.f32.mrf.mxu0
        %v517 = vadd.f32 0.0, %v516
        %518 = vmatmul.f32.gmra.mxu0 %v342
        %v519 = vpop.f32.mrf.mxu0
        %v520 = vadd.f32 0.0, %v519
        %521 = vdwg.mxu0
        %v522 = vadd.f32 %v441, %v475
        %v523 = vadd.f32 %v442, %v478
        %v524 = vadd.f32 %v443, %v481
        %v525 = vadd.f32 %v444, %v484
        %v526 = vadd.f32 %v445, %v487
        %v527 = vadd.f32 %v446, %v490
        %v528 = vadd.f32 %v447, %v493
        %v529 = vadd.f32 %v448, %v496
        %v530 = vadd.f32 %v449, %v499
        %v531 = vadd.f32 %v450, %v502
        %v532 = vadd.f32 %v451, %v505
        %v533 = vadd.f32 %v452, %v508
        %v534 = vadd.f32 %v453, %v511
        %v535 = vadd.f32 %v454, %v514
        %v536 = vadd.f32 %v455, %v517
        %v537 = vadd.f32 %v456, %v520
        %538 = vst [vmem:[#allocation3] sm:$0xff] %v522
        %539 = vst [vmem:[#allocation3 + $0x8] sm:$0xff] %v523
        %540 = vst [vmem:[#allocation3 + $0x10] sm:$0xff] %v524
        %541 = vst [vmem:[#allocation3 + $0x18] sm:$0xff] %v525
        %542 = vst [vmem:[#allocation3 + $0x20] sm:$0xff] %v526
        %543 = vst [vmem:[#allocation3 + $0x28] sm:$0xff] %v527
        %544 = vst [vmem:[#allocation3 + $0x30] sm:$0xff] %v528
        %545 = vst [vmem:[#allocation3 + $0x38] sm:$0xff] %v529
        %546 = vst [vmem:[#allocation3 + $0x40] sm:$0xff] %v530
        %547 = vst [vmem:[#allocation3 + $0x48] sm:$0xff] %v531
        %548 = vst [vmem:[#allocation3 + $0x50] sm:$0xff] %v532
        %549 = vst [vmem:[#allocation3 + $0x58] sm:$0xff] %v533
        %550 = vst [vmem:[#allocation3 + $0x60] sm:$0xff] %v534
        %551 = vst [vmem:[#allocation3 + $0x68] sm:$0xff] %v535
        %552 = vst [vmem:[#allocation3 + $0x70] sm:$0xff] %v536
        %553 = vst [vmem:[#allocation3 + $0x78] sm:$0xff] %v537
        %v554 = vld [vmem:[#allocation4] sm:$0xff]
        %v555 = vld [vmem:[#allocation4 + $0x8] sm:$0xff]
        %v556 = vld [vmem:[#allocation4 + $0x10] sm:$0xff]
        %v557 = vld [vmem:[#allocation4 + $0x18] sm:$0xff]
        %v558 = vld [vmem:[#allocation4 + $0x20] sm:$0xff]
        %v559 = vld [vmem:[#allocation4 + $0x28] sm:$0xff]
        %v560 = vld [vmem:[#allocation4 + $0x30] sm:$0xff]
        %v561 = vld [vmem:[#allocation4 + $0x38] sm:$0xff]
        %v562 = vld [vmem:[#allocation4 + $0x40] sm:$0xff]
        %v563 = vld [vmem:[#allocation4 + $0x48] sm:$0xff]
        %v564 = vld [vmem:[#allocation4 + $0x50] sm:$0xff]
        %v565 = vld [vmem:[#allocation4 + $0x58] sm:$0xff]
        %v566 = vld [vmem:[#allocation4 + $0x60] sm:$0xff]
        %v567 = vld [vmem:[#allocation4 + $0x68] sm:$0xff]
        %v568 = vld [vmem:[#allocation4 + $0x70] sm:$0xff]
        %v569 = vld [vmem:[#allocation4 + $0x78] sm:$0xff]
        %570 = vxpose.xlu0.b32.start [1/16] %v246, 128
        %571 = vxpose.xlu0.b32.cont [2/16] 0.0, 128
        %572 = vxpose.xlu0.b32.cont [3/16] 0.0, 128
        %573 = vxpose.xlu0.b32.cont [4/16] 0.0, 128
        %574 = vxpose.xlu0.b32.cont [5/16] 0.0, 128
        %575 = vxpose.xlu0.b32.cont [6/16] 0.0, 128
        %576 = vxpose.xlu0.b32.cont [7/16] 0.0, 128
        %577 = vxpose.xlu0.b32.cont [8/16] 0.0, 128
        %578 = vxpose.xlu0.b32.cont [9/16] 0.0, 128
        %579 = vxpose.xlu0.b32.cont [10/16] 0.0, 128
        %580 = vxpose.xlu0.b32.cont [11/16] 0.0, 128
        %581 = vxpose.xlu0.b32.cont [12/16] 0.0, 128
        %582 = vxpose.xlu0.b32.cont [13/16] 0.0, 128
        %583 = vxpose.xlu0.b32.cont [14/16] 0.0, 128
        %584 = vxpose.xlu0.b32.cont [15/16] 0.0, 128
        %585 = vxpose.xlu0.b32.end [16/16] 0.0, 128
        %v586 = vpop.trf.xlu0
        %v587 = vpop.trf.xlu0
        %v588 = vpop.trf.xlu0
        %v589 = vpop.trf.xlu0
        %v590 = vpop.trf.xlu0
        %v591 = vpop.trf.xlu0
        %v592 = vpop.trf.xlu0
        %v593 = vpop.trf.xlu0
        %v594 = vpop.trf.xlu0
        %v595 = vpop.trf.xlu0
        %v596 = vpop.trf.xlu0
        %v597 = vpop.trf.xlu0
        %v598 = vpop.trf.xlu0
        %v599 = vpop.trf.xlu0
        %v600 = vpop.trf.xlu0
        %v601 = vpop.trf.xlu0
        %v603 = vsel %vm295, %v586, 0
        %v606 = vsel %vm295, %v587, 0
        %v609 = vsel %vm295, %v588, 0
        %v612 = vsel %vm295, %v589, 0
        %v615 = vsel %vm295, %v590, 0
        %v618 = vsel %vm295, %v591, 0
        %v621 = vsel %vm295, %v592, 0
        %v624 = vsel %vm295, %v593, 0
        %v627 = vsel %vm295, %v594, 0
        %v630 = vsel %vm295, %v595, 0
        %v633 = vsel %vm295, %v596, 0
        %v636 = vsel %vm295, %v597, 0
        %v639 = vsel %vm295, %v598, 0
        %v642 = vsel %vm295, %v599, 0
        %v645 = vsel %vm295, %v600, 0
        %v648 = vsel %vm295, %v601, 0
        %650 = vmatpush.msra.mxu0 0.0
        %651 = vmatpush.msra.mxu0 0.0
        %652 = vmatpush.msra.mxu0 0.0
        %653 = vmatpush.msra.mxu0 0.0
        %654 = vmatpush.msra.mxu0 0.0
        %655 = vmatpush.msra.mxu0 0.0
        %656 = vmatpush.msra.mxu0 0.0
        %657 = vmatpush.msra.mxu0 0.0
        %658 = vmatpush.msra.mxu0 0.0
        %659 = vmatpush.msra.mxu0 0.0
        %660 = vmatpush.msra.mxu0 0.0
        %661 = vmatpush.msra.mxu0 0.0
        %662 = vmatpush.msra.mxu0 0.0
        %663 = vmatpush.msra.mxu0 0.0
        %664 = vmatpush.msra.mxu0 0.0
        %665 = vmatpush.msra.mxu0 %v246
        %666 = vmatmul.f32.gmra.mxu0 %v603
        %v667 = vpop.f32.mrf.mxu0
        %v668 = vadd.f32 0.0, %v667
        %669 = vmatmul.f32.gmra.mxu0 %v606
        %v670 = vpop.f32.mrf.mxu0
        %v671 = vadd.f32 0.0, %v670
        %672 = vmatmul.f32.gmra.mxu0 %v609
        %v673 = vpop.f32.mrf.mxu0
        %v674 = vadd.f32 0.0, %v673
        %675 = vmatmul.f32.gmra.mxu0 %v612
        %v676 = vpop.f32.mrf.mxu0
        %v677 = vadd.f32 0.0, %v676
        %678 = vmatmul.f32.gmra.mxu0 %v615
        %v679 = vpop.f32.mrf.mxu0
        %v680 = vadd.f32 0.0, %v679
        %681 = vmatmul.f32.gmra.mxu0 %v618
        %v682 = vpop.f32.mrf.mxu0
        %v683 = vadd.f32 0.0, %v682
        %684 = vmatmul.f32.gmra.mxu0 %v621
        %v685 = vpop.f32.mrf.mxu0
        %v686 = vadd.f32 0.0, %v685
        %687 = vmatmul.f32.gmra.mxu0 %v624
        %v688 = vpop.f32.mrf.mxu0
        %v689 = vadd.f32 0.0, %v688
        %690 = vmatmul.f32.gmra.mxu0 %v627
        %v691 = vpop.f32.mrf.mxu0
        %v692 = vadd.f32 0.0, %v691
        %693 = vmatmul.f32.gmra.mxu0 %v630
        %v694 = vpop.f32.mrf.mxu0
        %v695 = vadd.f32 0.0, %v694
        %696 = vmatmul.f32.gmra.mxu0 %v633
        %v697 = vpop.f32.mrf.mxu0
        %v698 = vadd.f32 0.0, %v697
        %699 = vmatmul.f32.gmra.mxu0 %v636
        %v700 = vpop.f32.mrf.mxu0
        %v701 = vadd.f32 0.0, %v700
        %702 = vmatmul.f32.gmra.mxu0 %v639
        %v703 = vpop.f32.mrf.mxu0
        %v704 = vadd.f32 0.0, %v703
        %705 = vmatmul.f32.gmra.mxu0 %v642
        %v706 = vpop.f32.mrf.mxu0
        %v707 = vadd.f32 0.0, %v706
        %708 = vmatmul.f32.gmra.mxu0 %v645
        %v709 = vpop.f32.mrf.mxu0
        %v710 = vadd.f32 0.0, %v709
        %711 = vmatmul.f32.gmra.mxu0 %v648
        %v712 = vpop.f32.mrf.mxu0
        %v713 = vadd.f32 0.0, %v712
        %714 = vdwg.mxu0
        %v715 = vadd.f32 %v554, %v668
        %v716 = vadd.f32 %v555, %v671
        %v717 = vadd.f32 %v556, %v674
        %v718 = vadd.f32 %v557, %v677
        %v719 = vadd.f32 %v558, %v680
        %v720 = vadd.f32 %v559, %v683
        %v721 = vadd.f32 %v560, %v686
        %v722 = vadd.f32 %v561, %v689
        %v723 = vadd.f32 %v562, %v692
        %v724 = vadd.f32 %v563, %v695
        %v725 = vadd.f32 %v564, %v698
        %v726 = vadd.f32 %v565, %v701
        %v727 = vadd.f32 %v566, %v704
        %v728 = vadd.f32 %v567, %v707
        %v729 = vadd.f32 %v568, %v710
        %v730 = vadd.f32 %v569, %v713
        %731 = vst [vmem:[#allocation4] sm:$0xff] %v715
        %732 = vst [vmem:[#allocation4 + $0x8] sm:$0xff] %v716
        %733 = vst [vmem:[#allocation4 + $0x10] sm:$0xff] %v717
        %734 = vst [vmem:[#allocation4 + $0x18] sm:$0xff] %v718
        %735 = vst [vmem:[#allocation4 + $0x20] sm:$0xff] %v719
        %736 = vst [vmem:[#allocation4 + $0x28] sm:$0xff] %v720
        %737 = vst [vmem:[#allocation4 + $0x30] sm:$0xff] %v721
        %738 = vst [vmem:[#allocation4 + $0x38] sm:$0xff] %v722
        %739 = vst [vmem:[#allocation4 + $0x40] sm:$0xff] %v723
        %740 = vst [vmem:[#allocation4 + $0x48] sm:$0xff] %v724
        %741 = vst [vmem:[#allocation4 + $0x50] sm:$0xff] %v725
        %742 = vst [vmem:[#allocation4 + $0x58] sm:$0xff] %v726
        %743 = vst [vmem:[#allocation4 + $0x60] sm:$0xff] %v727
        %744 = vst [vmem:[#allocation4 + $0x68] sm:$0xff] %v728
        %745 = vst [vmem:[#allocation4 + $0x70] sm:$0xff] %v729
        %746 = vst [vmem:[#allocation4 + $0x78] sm:$0xff] %v730
        %v747 = vld [vmem:[#allocation5] sm:$0x1]
        %v748 = vrot.slane %v245, 4
        %v749 = vadd.f32 %v245, %v748
        %v750 = vrot.slane %v749, 2
        %v751 = vadd.f32 %v749, %v750
        %v752 = vrot.slane %v751, 1
        %v753 = vadd.f32 %v751, %v752
        %v754 = vadd.f32 %v747, %v753
        %755 = vst [vmem:[#allocation5] sm:$0x1] %v754
        %v756 = vld [vmem:[#allocation6] sm:$0x1]
        %v757 = vrot.slane %v246, 4
        %v758 = vadd.f32 %v246, %v757
        %v759 = vrot.slane %v758, 2
        %v760 = vadd.f32 %v758, %v759
        %v761 = vrot.slane %v760, 1
        %v762 = vadd.f32 %v760, %v761
        %v763 = vadd.f32 %v756, %v762
        %764 = vst [vmem:[#allocation6] sm:$0x1] %v763
        %v765 = vld [vmem:[#allocation7] sm:$0x1]
        %v766 = vmul.f32 %v245, %v245
        %v767 = vrot.slane %v766, 4
        %v768 = vadd.f32 %v766, %v767
        %v769 = vrot.slane %v768, 2
        %v770 = vadd.f32 %v768, %v769
        %v771 = vrot.slane %v770, 1
        %v772 = vadd.f32 %v770, %v771
        %v773 = vadd.f32 %v765, %v772
        %774 = vst [vmem:[#allocation7] sm:$0x1] %v773
        %v775 = vld [vmem:[#allocation8] sm:$0x1]
        %v776 = vmul.f32 %v246, %v246
        %v777 = vrot.slane %v776, 4
        %v778 = vadd.f32 %v776, %v777
        %v779 = vrot.slane %v778, 2
        %v780 = vadd.f32 %v778, %v779
        %v781 = vrot.slane %v780, 1
        %v782 = vadd.f32 %v780, %v781
        %v783 = vadd.f32 %v775, %v782
        %784 = vst [vmem:[#allocation8] sm:$0x1] %v783
        %v785 = vld [vmem:[#allocation9] sm:$0x1]
        %v786 = vmul.f32 %v245, %v246
        %v787 = vrot.slane %v786, 4
        %v788 = vadd.f32 %v786, %v787
        %v789 = vrot.slane %v788, 2
        %v790 = vadd.f32 %v788, %v789
        %v791 = vrot.slane %v790, 1
        %v792 = vadd.f32 %v790, %v791
        %v793 = vadd.f32 %v785, %v792
        %794 = vst [vmem:[#allocation9] sm:$0x1] %v793
        %p795 = scmp.eq.s32.totalorder %s20, 1
        // Predicated region
        $region41: #{tpu_custom_call.1} parent=27 // pred_check
          %p796 = pneg %p795
        $region42: #{tpu_custom_call.1} parent=27 // pred_check_branch
          %798 = sbr.rel (%p796) target = $region44
        $region43: #{tpu_custom_call.1} parent=27 // pred_region
          %v799 = vlaneseq
          %v800 = vand.u32 %v799, 127
          %vm801 = vcmp.lt.s32.totalorder %v800, 32
          %v802 = vld [vmem:[#allocation5] sm:$0x1]
          %v803 = vld [vmem:[#allocation6] sm:$0x1]
          %v804 = vld [vmem:[#allocation7] sm:$0x1]
          %v805 = vld [vmem:[#allocation8] sm:$0x1]
          %v806 = vld [vmem:[#allocation9] sm:$0x1]
          %v807 = vmul.f32 %v802, %v802
          %v808 = vrcp.pop 16.0
          %v809 = vmul.f32 16.0, %v808
          %v810 = vsub.f32 1.0, %v809
          %v811 = vmul.f32 %v808, %v810
          %v812 = vadd.f32 %v808, %v811
          %vm813 = vweird.f32 %v808
          %v814 = vsel %vm813, %v808, %v812
          %v815 = vmul.f32 %v807, %v814
          %v816 = vsub.f32 %v804, %v815
          %v817 = vmul.f32 %v803, %v803
          %v818 = vmul.f32 %v817, %v814
          %v819 = vsub.f32 %v805, %v818
          %v820 = vmul.f32 %v802, %v803
          %v821 = vmul.f32 %v820, %v814
          %v822 = vsub.f32 %v806, %v821
          %v823 = vrcp.pop 15.0
          %v824 = vmul.f32 15.0, %v823
          %v825 = vsub.f32 1.0, %v824
          %v826 = vmul.f32 %v823, %v825
          %v827 = vadd.f32 %v823, %v826
          %vm828 = vweird.f32 %v823
          %v829 = vsel %vm828, %v823, %v827
          %v830 = vmul.f32 %v816, %v829
          %v831 = vrsqrt.pop %v830
          %v832 = vmul.f32 %v831, %v830
          %v833 = vmul.f32 %v832, %v831
          %v834 = vmul.f32 0.5, %v833
          %v835 = vsub.f32 1.5, %v834
          %v836 = vmul.f32 %v831, %v835
          %vm837 = vweird.f32 %v830
          %vm838 = vweird.f32 %v831
          %vm839 = vmor %vm837, %vm838
          %v840 = vsel %vm839, %v831, %v836
          %v841 = vsel %vm801, %v840, 0.0
          %v842 = vmul.f32 %v819, %v829
          %v843 = vrsqrt.pop %v842
          %v844 = vmul.f32 %v843, %v842
          %v845 = vmul.f32 %v844, %v843
          %v846 = vmul.f32 0.5, %v845
          %v847 = vsub.f32 1.5, %v846
          %v848 = vmul.f32 %v843, %v847
          %vm849 = vweird.f32 %v842
          %vm850 = vweird.f32 %v843
          %vm851 = vmor %vm849, %vm850
          %v852 = vsel %vm851, %v843, %v848
          %v853 = vsel %vm801, %v852, 0.0
          %v854 = vmul.f32 %v822, %v841
          %v855 = vmul.f32 %v854, %v853
          %vm856 = vcmask 1040384
          %v857 = vsel %vm856, %v855, 0.0
          %858 = vadd.xlane.f32.xlu0 %v857
          %v859 = vpop.xlane.xlu0 %858
          %v860 = vrot.slane %v859, 4
          %v861 = vadd.f32 %v859, %v860
          %v862 = vrot.slane %v861, 2
          %v863 = vadd.f32 %v861, %v862
          %v864 = vrot.slane %v863, 1
          %v865 = vadd.f32 %v863, %v864
          %s866 = vtos %v865
          %s867 = ssub.f32 0.0, %s866
          %s868 = smul.f32 %s867, 0.03125
          %v869 = vmul.f32 %v816, %v841
          %v870 = vmul.f32 %v869, %v841
          %v871 = vsel %vm856, %v870, 0.0
          %872 = vadd.xlane.f32.xlu0 %v871
          %v873 = vpop.xlane.xlu0 %872
          %v874 = vrot.slane %v873, 4
          %v875 = vadd.f32 %v873, %v874
          %v876 = vrot.slane %v875, 2
          %v877 = vadd.f32 %v875, %v876
          %v878 = vrot.slane %v877, 1
          %v879 = vadd.f32 %v877, %v878
          %s880 = vtos %v879
          %s881 = smul.f32 %s880, 0.03125
          %v882 = vmul.f32 %v819, %v853
          %v883 = vmul.f32 %v882, %v853
          %v884 = vsel %vm856, %v883, 0.0
          %885 = vadd.xlane.f32.xlu0 %v884
          %v886 = vpop.xlane.xlu0 %885
          %v887 = vrot.slane %v886, 4
          %v888 = vadd.f32 %v886, %v887
          %v889 = vrot.slane %v888, 2
          %v890 = vadd.f32 %v888, %v889
          %v891 = vrot.slane %v890, 1
          %v892 = vadd.f32 %v890, %v891
          %s893 = vtos %v892
          %s894 = smul.f32 %s893, 0.03125
          %v895 = vmul.f32 %v841, 0.17677669
          %v896 = vmul.f32 %v802, %v895
          %v897 = vmul.f32 %v896, 0.25
          %898 = vxpose.xlu0.b32.start [1/16] %v895, 128
          %899 = vxpose.xlu0.b32.cont [2/16] 0.0, 128
          %900 = vxpose.xlu0.b32.cont [3/16] 0.0, 128
          %901 = vxpose.xlu0.b32.cont [4/16] 0.0, 128
          %902 = vxpose.xlu0.b32.cont [5/16] 0.0, 128
          %903 = vxpose.xlu0.b32.cont [6/16] 0.0, 128
          %904 = vxpose.xlu0.b32.cont [7/16] 0.0, 128
          %905 = vxpose.xlu0.b32.cont [8/16] 0.0, 128
          %906 = vxpose.xlu0.b32.cont [9/16] 0.0, 128
          %907 = vxpose.xlu0.b32.cont [10/16] 0.0, 128
          %908 = vxpose.xlu0.b32.cont [11/16] 0.0, 128
          %909 = vxpose.xlu0.b32.cont [12/16] 0.0, 128
          %910 = vxpose.xlu0.b32.cont [13/16] 0.0, 128
          %911 = vxpose.xlu0.b32.cont [14/16] 0.0, 128
          %912 = vxpose.xlu0.b32.cont [15/16] 0.0, 128
          %913 = vxpose.xlu0.b32.end [16/16] 0.0, 128
          %v914 = vpop.trf.xlu0
          %v915 = vpop.trf.xlu0
          %v916 = vpop.trf.xlu0
          %v917 = vpop.trf.xlu0
          %v918 = vpop.trf.xlu0
          %v919 = vpop.trf.xlu0
          %v920 = vpop.trf.xlu0
          %v921 = vpop.trf.xlu0
          %v922 = vpop.trf.xlu0
          %v923 = vpop.trf.xlu0
          %v924 = vpop.trf.xlu0
          %v925 = vpop.trf.xlu0
          %v926 = vpop.trf.xlu0
          %v927 = vpop.trf.xlu0
          %v928 = vpop.trf.xlu0
          %v929 = vpop.trf.xlu0
          %vm930 = vcmask 7168
          %v932 = vsel %vm930, %v914, 0
          %v935 = vsel %vm930, %v915, 0
          %v938 = vsel %vm930, %v916, 0
          %v941 = vsel %vm930, %v917, 0
          %v944 = vsel %vm930, %v918, 0
          %v947 = vsel %vm930, %v919, 0
          %v950 = vsel %vm930, %v920, 0
          %v953 = vsel %vm930, %v921, 0
          %v956 = vsel %vm930, %v922, 0
          %v959 = vsel %vm930, %v923, 0
          %v962 = vsel %vm930, %v924, 0
          %v965 = vsel %vm930, %v925, 0
          %v968 = vsel %vm930, %v926, 0
          %v971 = vsel %vm930, %v927, 0
          %v974 = vsel %vm930, %v928, 0
          %v977 = vsel %vm930, %v929, 0
          %v980 = vsel %vm856, %v895, 0
          %982 = vmatpush.msra.mxu0 0.0
          %983 = vmatpush.msra.mxu0 0.0
          %984 = vmatpush.msra.mxu0 0.0
          %985 = vmatpush.msra.mxu0 0.0
          %986 = vmatpush.msra.mxu0 0.0
          %987 = vmatpush.msra.mxu0 0.0
          %988 = vmatpush.msra.mxu0 0.0
          %989 = vmatpush.msra.mxu0 0.0
          %990 = vmatpush.msra.mxu0 0.0
          %991 = vmatpush.msra.mxu0 0.0
          %992 = vmatpush.msra.mxu0 0.0
          %993 = vmatpush.msra.mxu0 0.0
          %994 = vmatpush.msra.mxu0 0.0
          %995 = vmatpush.msra.mxu0 0.0
          %996 = vmatpush.msra.mxu0 0.0
          %997 = vmatpush.msra.mxu0 %v980
          %998 = vmatmul.f32.gmra.mxu0 %v932
          %v999 = vpop.f32.mrf.mxu0
          %v1000 = vadd.f32 0.0, %v999
          %1001 = vmatmul.f32.gmra.mxu0 %v935
          %v1002 = vpop.f32.mrf.mxu0
          %v1003 = vadd.f32 0.0, %v1002
          %1004 = vmatmul.f32.gmra.mxu0 %v938
          %v1005 = vpop.f32.mrf.mxu0
          %v1006 = vadd.f32 0.0, %v1005
          %1007 = vmatmul.f32.gmra.mxu0 %v941
          %v1008 = vpop.f32.mrf.mxu0
          %v1009 = vadd.f32 0.0, %v1008
          %1010 = vmatmul.f32.gmra.mxu0 %v944
          %v1011 = vpop.f32.mrf.mxu0
          %v1012 = vadd.f32 0.0, %v1011
          %1013 = vmatmul.f32.gmra.mxu0 %v947
          %v1014 = vpop.f32.mrf.mxu0
          %v1015 = vadd.f32 0.0, %v1014
          %1016 = vmatmul.f32.gmra.mxu0 %v950
          %v1017 = vpop.f32.mrf.mxu0
          %v1018 = vadd.f32 0.0, %v1017
          %1019 = vmatmul.f32.gmra.mxu0 %v953
          %v1020 = vpop.f32.mrf.mxu0
          %v1021 = vadd.f32 0.0, %v1020
          %1022 = vmatmul.f32.gmra.mxu0 %v956
          %v1023 = vpop.f32.mrf.mxu0
          %v1024 = vadd.f32 0.0, %v1023
          %1025 = vmatmul.f32.gmra.mxu0 %v959
          %v1026 = vpop.f32.mrf.mxu0
          %v1027 = vadd.f32 0.0, %v1026
          %1028 = vmatmul.f32.gmra.mxu0 %v962
          %v1029 = vpop.f32.mrf.mxu0
          %v1030 = vadd.f32 0.0, %v1029
          %1031 = vmatmul.f32.gmra.mxu0 %v965
          %v1032 = vpop.f32.mrf.mxu0
          %v1033 = vadd.f32 0.0, %v1032
          %1034 = vmatmul.f32.gmra.mxu0 %v968
          %v1035 = vpop.f32.mrf.mxu0
          %v1036 = vadd.f32 0.0, %v1035
          %1037 = vmatmul.f32.gmra.mxu0 %v971
          %v1038 = vpop.f32.mrf.mxu0
          %v1039 = vadd.f32 0.0, %v1038
          %1040 = vmatmul.f32.gmra.mxu0 %v974
          %v1041 = vpop.f32.mrf.mxu0
          %v1042 = vadd.f32 0.0, %v1041
          %1043 = vmatmul.f32.gmra.mxu0 %v977
          %v1044 = vpop.f32.mrf.mxu0
          %v1045 = vadd.f32 0.0, %v1044
          %1046 = vdwg.mxu0
          %1047 = vxpose.xlu0.b32.start [1/16] %v897, 128
          %1048 = vxpose.xlu0.b32.cont [2/16] 0.0, 128
          %1049 = vxpose.xlu0.b32.cont [3/16] 0.0, 128
          %1050 = vxpose.xlu0.b32.cont [4/16] 0.0, 128
          %1051 = vxpose.xlu0.b32.cont [5/16] 0.0, 128
          %1052 = vxpose.xlu0.b32.cont [6/16] 0.0, 128
          %1053 = vxpose.xlu0.b32.cont [7/16] 0.0, 128
          %1054 = vxpose.xlu0.b32.cont [8/16] 0.0, 128
          %1055 = vxpose.xlu0.b32.cont [9/16] 0.0, 128
          %1056 = vxpose.xlu0.b32.cont [10/16] 0.0, 128
          %1057 = vxpose.xlu0.b32.cont [11/16] 0.0, 128
          %1058 = vxpose.xlu0.b32.cont [12/16] 0.0, 128
          %1059 = vxpose.xlu0.b32.cont [13/16] 0.0, 128
          %1060 = vxpose.xlu0.b32.cont [14/16] 0.0, 128
          %1061 = vxpose.xlu0.b32.cont [15/16] 0.0, 128
          %1062 = vxpose.xlu0.b32.end [16/16] 0.0, 128
          %v1063 = vpop.trf.xlu0
          %v1064 = vpop.trf.xlu0
          %v1065 = vpop.trf.xlu0
          %v1066 = vpop.trf.xlu0
          %v1067 = vpop.trf.xlu0
          %v1068 = vpop.trf.xlu0
          %v1069 = vpop.trf.xlu0
          %v1070 = vpop.trf.xlu0
          %v1071 = vpop.trf.xlu0
          %v1072 = vpop.trf.xlu0
          %v1073 = vpop.trf.xlu0
          %v1074 = vpop.trf.xlu0
          %v1075 = vpop.trf.xlu0
          %v1076 = vpop.trf.xlu0
          %v1077 = vpop.trf.xlu0
          %v1078 = vpop.trf.xlu0
          %v1080 = vsel %vm930, %v1063, 0
          %v1083 = vsel %vm930, %v1064, 0
          %v1086 = vsel %vm930, %v1065, 0
          %v1089 = vsel %vm930, %v1066, 0
          %v1092 = vsel %vm930, %v1067, 0
          %v1095 = vsel %vm930, %v1068, 0
          %v1098 = vsel %vm930, %v1069, 0
          %v1101 = vsel %vm930, %v1070, 0
          %v1104 = vsel %vm930, %v1071, 0
          %v1107 = vsel %vm930, %v1072, 0
          %v1110 = vsel %vm930, %v1073, 0
          %v1113 = vsel %vm930, %v1074, 0
          %v1116 = vsel %vm930, %v1075, 0
          %v1119 = vsel %vm930, %v1076, 0
          %v1122 = vsel %vm930, %v1077, 0
          %v1125 = vsel %vm930, %v1078, 0
          %v1128 = vsel %vm856, %v897, 0
          %1130 = vmatpush.msra.mxu0 0.0
          %1131 = vmatpush.msra.mxu0 0.0
          %1132 = vmatpush.msra.mxu0 0.0
          %1133 = vmatpush.msra.mxu0 0.0
          %1134 = vmatpush.msra.mxu0 0.0
          %1135 = vmatpush.msra.mxu0 0.0
          %1136 = vmatpush.msra.mxu0 0.0
          %1137 = vmatpush.msra.mxu0 0.0
          %1138 = vmatpush.msra.mxu0 0.0
          %1139 = vmatpush.msra.mxu0 0.0
          %1140 = vmatpush.msra.mxu0 0.0
          %1141 = vmatpush.msra.mxu0 0.0
          %1142 = vmatpush.msra.mxu0 0.0
          %1143 = vmatpush.msra.mxu0 0.0
          %1144 = vmatpush.msra.mxu0 0.0
          %1145 = vmatpush.msra.mxu0 %v1128
          %1146 = vmatmul.f32.gmra.mxu0 %v1080
          %v1147 = vpop.f32.mrf.mxu0
          %v1148 = vadd.f32 0.0, %v1147
          %1149 = vmatmul.f32.gmra.mxu0 %v1083
          %v1150 = vpop.f32.mrf.mxu0
          %v1151 = vadd.f32 0.0, %v1150
          %1152 = vmatmul.f32.gmra.mxu0 %v1086
          %v1153 = vpop.f32.mrf.mxu0
          %v1154 = vadd.f32 0.0, %v1153
          %1155 = vmatmul.f32.gmra.mxu0 %v1089
          %v1156 = vpop.f32.mrf.mxu0
          %v1157 = vadd.f32 0.0, %v1156
          %1158 = vmatmul.f32.gmra.mxu0 %v1092
          %v1159 = vpop.f32.mrf.mxu0
          %v1160 = vadd.f32 0.0, %v1159
          %1161 = vmatmul.f32.gmra.mxu0 %v1095
          %v1162 = vpop.f32.mrf.mxu0
          %v1163 = vadd.f32 0.0, %v1162
          %1164 = vmatmul.f32.gmra.mxu0 %v1098
          %v1165 = vpop.f32.mrf.mxu0
          %v1166 = vadd.f32 0.0, %v1165
          %1167 = vmatmul.f32.gmra.mxu0 %v1101
          %v1168 = vpop.f32.mrf.mxu0
          %v1169 = vadd.f32 0.0, %v1168
          %1170 = vmatmul.f32.gmra.mxu0 %v1104
          %v1171 = vpop.f32.mrf.mxu0
          %v1172 = vadd.f32 0.0, %v1171
          %1173 = vmatmul.f32.gmra.mxu0 %v1107
          %v1174 = vpop.f32.mrf.mxu0
          %v1175 = vadd.f32 0.0, %v1174
          %1176 = vmatmul.f32.gmra.mxu0 %v1110
          %v1177 = vpop.f32.mrf.mxu0
          %v1178 = vadd.f32 0.0, %v1177
          %1179 = vmatmul.f32.gmra.mxu0 %v1113
          %v1180 = vpop.f32.mrf.mxu0
          %v1181 = vadd.f32 0.0, %v1180
          %1182 = vmatmul.f32.gmra.mxu0 %v1116
          %v1183 = vpop.f32.mrf.mxu0
          %v1184 = vadd.f32 0.0, %v1183
          %1185 = vmatmul.f32.gmra.mxu0 %v1119
          %v1186 = vpop.f32.mrf.mxu0
          %v1187 = vadd.f32 0.0, %v1186
          %1188 = vmatmul.f32.gmra.mxu0 %v1122
          %v1189 = vpop.f32.mrf.mxu0
          %v1190 = vadd.f32 0.0, %v1189
          %1191 = vmatmul.f32.gmra.mxu0 %v1125
          %v1192 = vpop.f32.mrf.mxu0
          %v1193 = vadd.f32 0.0, %v1192
          %1194 = vdwg.mxu0
          %v1195 = vld [vmem:[#allocation2] sm:$0xff]
          %v1196 = vld [vmem:[#allocation2 + $0x8] sm:$0xff]
          %v1197 = vld [vmem:[#allocation2 + $0x10] sm:$0xff]
          %v1198 = vld [vmem:[#allocation2 + $0x18] sm:$0xff]
          %v1199 = vld [vmem:[#allocation2 + $0x20] sm:$0xff]
          %v1200 = vld [vmem:[#allocation2 + $0x28] sm:$0xff]
          %v1201 = vld [vmem:[#allocation2 + $0x30] sm:$0xff]
          %v1202 = vld [vmem:[#allocation2 + $0x38] sm:$0xff]
          %v1203 = vld [vmem:[#allocation2 + $0x40] sm:$0xff]
          %v1204 = vld [vmem:[#allocation2 + $0x48] sm:$0xff]
          %v1205 = vld [vmem:[#allocation2 + $0x50] sm:$0xff]
          %v1206 = vld [vmem:[#allocation2 + $0x58] sm:$0xff]
          %v1207 = vld [vmem:[#allocation2 + $0x60] sm:$0xff]
          %v1208 = vld [vmem:[#allocation2 + $0x68] sm:$0xff]
          %v1209 = vld [vmem:[#allocation2 + $0x70] sm:$0xff]
          %v1210 = vld [vmem:[#allocation2 + $0x78] sm:$0xff]
          %v1211 = vmul.f32 %v1195, %v1000
          %v1212 = vmul.f32 %v1196, %v1003
          %v1213 = vmul.f32 %v1197, %v1006
          %v1214 = vmul.f32 %v1198, %v1009
          %v1215 = vmul.f32 %v1199, %v1012
          %v1216 = vmul.f32 %v1200, %v1015
          %v1217 = vmul.f32 %v1201, %v1018
          %v1218 = vmul.f32 %v1202, %v1021
          %v1219 = vmul.f32 %v1203, %v1024
          %v1220 = vmul.f32 %v1204, %v1027
          %v1221 = vmul.f32 %v1205, %v1030
          %v1222 = vmul.f32 %v1206, %v1033
          %v1223 = vmul.f32 %v1207, %v1036
          %v1224 = vmul.f32 %v1208, %v1039
          %v1225 = vmul.f32 %v1209, %v1042
          %v1226 = vmul.f32 %v1210, %v1045
          %v1227 = vsub.f32 %v1211, %v1148
          %v1228 = vsub.f32 %v1212, %v1151
          %v1229 = vsub.f32 %v1213, %v1154
          %v1230 = vsub.f32 %v1214, %v1157
          %v1231 = vsub.f32 %v1215, %v1160
          %v1232 = vsub.f32 %v1216, %v1163
          %v1233 = vsub.f32 %v1217, %v1166
          %v1234 = vsub.f32 %v1218, %v1169
          %v1235 = vsub.f32 %v1219, %v1172
          %v1236 = vsub.f32 %v1220, %v1175
          %v1237 = vsub.f32 %v1221, %v1178
          %v1238 = vsub.f32 %v1222, %v1181
          %v1239 = vsub.f32 %v1223, %v1184
          %v1240 = vsub.f32 %v1224, %v1187
          %v1241 = vsub.f32 %v1225, %v1190
          %v1242 = vsub.f32 %v1226, %v1193
          %v1243 = vmul.f32 %v1227, %v1227
          %v1244 = vmul.f32 %v1228, %v1228
          %v1245 = vmul.f32 %v1229, %v1229
          %v1246 = vmul.f32 %v1230, %v1230
          %v1247 = vmul.f32 %v1231, %v1231
          %v1248 = vmul.f32 %v1232, %v1232
          %v1249 = vmul.f32 %v1233, %v1233
          %v1250 = vmul.f32 %v1234, %v1234
          %v1251 = vmul.f32 %v1235, %v1235
          %v1252 = vmul.f32 %v1236, %v1236
          %v1253 = vmul.f32 %v1237, %v1237
          %v1254 = vmul.f32 %v1238, %v1238
          %v1255 = vmul.f32 %v1239, %v1239
          %v1256 = vmul.f32 %v1240, %v1240
          %v1257 = vmul.f32 %v1241, %v1241
          %v1258 = vmul.f32 %v1242, %v1242
          %v1259 = vadd.f32 %v1243, %v1244
          %v1260 = vadd.f32 %v1259, %v1245
          %v1261 = vadd.f32 %v1260, %v1246
          %v1262 = vadd.f32 %v1261, %v1247
          %v1263 = vadd.f32 %v1262, %v1248
          %v1264 = vadd.f32 %v1263, %v1249
          %v1265 = vadd.f32 %v1264, %v1250
          %v1266 = vadd.f32 %v1265, %v1251
          %v1267 = vadd.f32 %v1266, %v1252
          %v1268 = vadd.f32 %v1267, %v1253
          %v1269 = vadd.f32 %v1268, %v1254
          %v1270 = vadd.f32 %v1269, %v1255
          %v1271 = vadd.f32 %v1270, %v1256
          %v1272 = vadd.f32 %v1271, %v1257
          %v1273 = vadd.f32 %v1272, %v1258
          %1274 = vadd.xlane.f32.xlu0 %v1273
          %v1275 = vpop.xlane.xlu0 %1274
          %v1276 = vrot.slane %v1275, 4
          %v1277 = vadd.f32 %v1275, %v1276
          %v1278 = vrot.slane %v1277, 2
          %v1279 = vadd.f32 %v1277, %v1278
          %v1280 = vrot.slane %v1279, 1
          %v1281 = vadd.f32 %v1279, %v1280
          %s1282 = vtos %v1281
          %s1283 = smul.f32 %s881, 2.0
          %s1284 = ssub.f32 %s1282, %s1283
          %s1285 = sadd.f32 %s1284, 32.0
          %v1286 = vmul.f32 %v853, 0.17677669
          %v1287 = vmul.f32 %v803, %v1286
          %v1288 = vmul.f32 %v1287, 0.25
          %1289 = vxpose.xlu0.b32.start [1/16] %v1286, 128
          %1290 = vxpose.xlu0.b32.cont [2/16] 0.0, 128
          %1291 = vxpose.xlu0.b32.cont [3/16] 0.0, 128
          %1292 = vxpose.xlu0.b32.cont [4/16] 0.0, 128
          %1293 = vxpose.xlu0.b32.cont [5/16] 0.0, 128
          %1294 = vxpose.xlu0.b32.cont [6/16] 0.0, 128
          %1295 = vxpose.xlu0.b32.cont [7/16] 0.0, 128
          %1296 = vxpose.xlu0.b32.cont [8/16] 0.0, 128
          %1297 = vxpose.xlu0.b32.cont [9/16] 0.0, 128
          %1298 = vxpose.xlu0.b32.cont [10/16] 0.0, 128
          %1299 = vxpose.xlu0.b32.cont [11/16] 0.0, 128
          %1300 = vxpose.xlu0.b32.cont [12/16] 0.0, 128
          %1301 = vxpose.xlu0.b32.cont [13/16] 0.0, 128
          %1302 = vxpose.xlu0.b32.cont [14/16] 0.0, 128
          %1303 = vxpose.xlu0.b32.cont [15/16] 0.0, 128
          %1304 = vxpose.xlu0.b32.end [16/16] 0.0, 128
          %v1305 = vpop.trf.xlu0
          %v1306 = vpop.trf.xlu0
          %v1307 = vpop.trf.xlu0
          %v1308 = vpop.trf.xlu0
          %v1309 = vpop.trf.xlu0
          %v1310 = vpop.trf.xlu0
          %v1311 = vpop.trf.xlu0
          %v1312 = vpop.trf.xlu0
          %v1313 = vpop.trf.xlu0
          %v1314 = vpop.trf.xlu0
          %v1315 = vpop.trf.xlu0
          %v1316 = vpop.trf.xlu0
          %v1317 = vpop.trf.xlu0
          %v1318 = vpop.trf.xlu0
          %v1319 = vpop.trf.xlu0
          %v1320 = vpop.trf.xlu0
          %v1322 = vsel %vm930, %v1305, 0
          %v1325 = vsel %vm930, %v1306, 0
          %v1328 = vsel %vm930, %v1307, 0
          %v1331 = vsel %vm930, %v1308, 0
          %v1334 = vsel %vm930, %v1309, 0
          %v1337 = vsel %vm930, %v1310, 0
          %v1340 = vsel %vm930, %v1311, 0
          %v1343 = vsel %vm930, %v1312, 0
          %v1346 = vsel %vm930, %v1313, 0
          %v1349 = vsel %vm930, %v1314, 0
          %v1352 = vsel %vm930, %v1315, 0
          %v1355 = vsel %vm930, %v1316, 0
          %v1358 = vsel %vm930, %v1317, 0
          %v1361 = vsel %vm930, %v1318, 0
          %v1364 = vsel %vm930, %v1319, 0
          %v1367 = vsel %vm930, %v1320, 0
          %v1370 = vsel %vm856, %v1286, 0
          %1372 = vmatpush.msra.mxu0 0.0
          %1373 = vmatpush.msra.mxu0 0.0
          %1374 = vmatpush.msra.mxu0 0.0
          %1375 = vmatpush.msra.mxu0 0.0
          %1376 = vmatpush.msra.mxu0 0.0
          %1377 = vmatpush.msra.mxu0 0.0
          %1378 = vmatpush.msra.mxu0 0.0
          %1379 = vmatpush.msra.mxu0 0.0
          %1380 = vmatpush.msra.mxu0 0.0
          %1381 = vmatpush.msra.mxu0 0.0
          %1382 = vmatpush.msra.mxu0 0.0
          %1383 = vmatpush.msra.mxu0 0.0
          %1384 = vmatpush.msra.mxu0 0.0
          %1385 = vmatpush.msra.mxu0 0.0
          %1386 = vmatpush.msra.mxu0 0.0
          %1387 = vmatpush.msra.mxu0 %v1370
          %1388 = vmatmul.f32.gmra.mxu0 %v1322
          %v1389 = vpop.f32.mrf.mxu0
          %v1390 = vadd.f32 0.0, %v1389
          %1391 = vmatmul.f32.gmra.mxu0 %v1325
          %v1392 = vpop.f32.mrf.mxu0
          %v1393 = vadd.f32 0.0, %v1392
          %1394 = vmatmul.f32.gmra.mxu0 %v1328
          %v1395 = vpop.f32.mrf.mxu0
          %v1396 = vadd.f32 0.0, %v1395
          %1397 = vmatmul.f32.gmra.mxu0 %v1331
          %v1398 = vpop.f32.mrf.mxu0
          %v1399 = vadd.f32 0.0, %v1398
          %1400 = vmatmul.f32.gmra.mxu0 %v1334
          %v1401 = vpop.f32.mrf.mxu0
          %v1402 = vadd.f32 0.0, %v1401
          %1403 = vmatmul.f32.gmra.mxu0 %v1337
          %v1404 = vpop.f32.mrf.mxu0
          %v1405 = vadd.f32 0.0, %v1404
          %1406 = vmatmul.f32.gmra.mxu0 %v1340
          %v1407 = vpop.f32.mrf.mxu0
          %v1408 = vadd.f32 0.0, %v1407
          %1409 = vmatmul.f32.gmra.mxu0 %v1343
          %v1410 = vpop.f32.mrf.mxu0
          %v1411 = vadd.f32 0.0, %v1410
          %1412 = vmatmul.f32.gmra.mxu0 %v1346
          %v1413 = vpop.f32.mrf.mxu0
          %v1414 = vadd.f32 0.0, %v1413
          %1415 = vmatmul.f32.gmra.mxu0 %v1349
          %v1416 = vpop.f32.mrf.mxu0
          %v1417 = vadd.f32 0.0, %v1416
          %1418 = vmatmul.f32.gmra.mxu0 %v1352
          %v1419 = vpop.f32.mrf.mxu0
          %v1420 = vadd.f32 0.0, %v1419
          %1421 = vmatmul.f32.gmra.mxu0 %v1355
          %v1422 = vpop.f32.mrf.mxu0
          %v1423 = vadd.f32 0.0, %v1422
          %1424 = vmatmul.f32.gmra.mxu0 %v1358
          %v1425 = vpop.f32.mrf.mxu0
          %v1426 = vadd.f32 0.0, %v1425
          %1427 = vmatmul.f32.gmra.mxu0 %v1361
          %v1428 = vpop.f32.mrf.mxu0
          %v1429 = vadd.f32 0.0, %v1428
          %1430 = vmatmul.f32.gmra.mxu0 %v1364
          %v1431 = vpop.f32.mrf.mxu0
          %v1432 = vadd.f32 0.0, %v1431
          %1433 = vmatmul.f32.gmra.mxu0 %v1367
          %v1434 = vpop.f32.mrf.mxu0
          %v1435 = vadd.f32 0.0, %v1434
          %1436 = vdwg.mxu0
          %1437 = vxpose.xlu0.b32.start [1/16] %v1288, 128
          %1438 = vxpose.xlu0.b32.cont [2/16] 0.0, 128
          %1439 = vxpose.xlu0.b32.cont [3/16] 0.0, 128
          %1440 = vxpose.xlu0.b32.cont [4/16] 0.0, 128
          %1441 = vxpose.xlu0.b32.cont [5/16] 0.0, 128
          %1442 = vxpose.xlu0.b32.cont [6/16] 0.0, 128
          %1443 = vxpose.xlu0.b32.cont [7/16] 0.0, 128
          %1444 = vxpose.xlu0.b32.cont [8/16] 0.0, 128
          %1445 = vxpose.xlu0.b32.cont [9/16] 0.0, 128
          %1446 = vxpose.xlu0.b32.cont [10/16] 0.0, 128
          %1447 = vxpose.xlu0.b32.cont [11/16] 0.0, 128
          %1448 = vxpose.xlu0.b32.cont [12/16] 0.0, 128
          %1449 = vxpose.xlu0.b32.cont [13/16] 0.0, 128
          %1450 = vxpose.xlu0.b32.cont [14/16] 0.0, 128
          %1451 = vxpose.xlu0.b32.cont [15/16] 0.0, 128
          %1452 = vxpose.xlu0.b32.end [16/16] 0.0, 128
          %v1453 = vpop.trf.xlu0
          %v1454 = vpop.trf.xlu0
          %v1455 = vpop.trf.xlu0
          %v1456 = vpop.trf.xlu0
          %v1457 = vpop.trf.xlu0
          %v1458 = vpop.trf.xlu0
          %v1459 = vpop.trf.xlu0
          %v1460 = vpop.trf.xlu0
          %v1461 = vpop.trf.xlu0
          %v1462 = vpop.trf.xlu0
          %v1463 = vpop.trf.xlu0
          %v1464 = vpop.trf.xlu0
          %v1465 = vpop.trf.xlu0
          %v1466 = vpop.trf.xlu0
          %v1467 = vpop.trf.xlu0
          %v1468 = vpop.trf.xlu0
          %v1470 = vsel %vm930, %v1453, 0
          %v1473 = vsel %vm930, %v1454, 0
          %v1476 = vsel %vm930, %v1455, 0
          %v1479 = vsel %vm930, %v1456, 0
          %v1482 = vsel %vm930, %v1457, 0
          %v1485 = vsel %vm930, %v1458, 0
          %v1488 = vsel %vm930, %v1459, 0
          %v1491 = vsel %vm930, %v1460, 0
          %v1494 = vsel %vm930, %v1461, 0
          %v1497 = vsel %vm930, %v1462, 0
          %v1500 = vsel %vm930, %v1463, 0
          %v1503 = vsel %vm930, %v1464, 0
          %v1506 = vsel %vm930, %v1465, 0
          %v1509 = vsel %vm930, %v1466, 0
          %v1512 = vsel %vm930, %v1467, 0
          %v1515 = vsel %vm930, %v1468, 0
          %v1518 = vsel %vm856, %v1288, 0
          %1520 = vmatpush.msra.mxu0 0.0
          %1521 = vmatpush.msra.mxu0 0.0
          %1522 = vmatpush.msra.mxu0 0.0
          %1523 = vmatpush.msra.mxu0 0.0
          %1524 = vmatpush.msra.mxu0 0.0
          %1525 = vmatpush.msra.mxu0 0.0
          %1526 = vmatpush.msra.mxu0 0.0
          %1527 = vmatpush.msra.mxu0 0.0
          %1528 = vmatpush.msra.mxu0 0.0
          %1529 = vmatpush.msra.mxu0 0.0
          %1530 = vmatpush.msra.mxu0 0.0
          %1531 = vmatpush.msra.mxu0 0.0
          %1532 = vmatpush.msra.mxu0 0.0
          %1533 = vmatpush.msra.mxu0 0.0
          %1534 = vmatpush.msra.mxu0 0.0
          %1535 = vmatpush.msra.mxu0 %v1518
          %1536 = vmatmul.f32.gmra.mxu0 %v1470
          %v1537 = vpop.f32.mrf.mxu0
          %v1538 = vadd.f32 0.0, %v1537
          %1539 = vmatmul.f32.gmra.mxu0 %v1473
          %v1540 = vpop.f32.mrf.mxu0
          %v1541 = vadd.f32 0.0, %v1540
          %1542 = vmatmul.f32.gmra.mxu0 %v1476
          %v1543 = vpop.f32.mrf.mxu0
          %v1544 = vadd.f32 0.0, %v1543
          %1545 = vmatmul.f32.gmra.mxu0 %v1479
          %v1546 = vpop.f32.mrf.mxu0
          %v1547 = vadd.f32 0.0, %v1546
          %1548 = vmatmul.f32.gmra.mxu0 %v1482
          %v1549 = vpop.f32.mrf.mxu0
          %v1550 = vadd.f32 0.0, %v1549
          %1551 = vmatmul.f32.gmra.mxu0 %v1485
          %v1552 = vpop.f32.mrf.mxu0
          %v1553 = vadd.f32 0.0, %v1552
          %1554 = vmatmul.f32.gmra.mxu0 %v1488
          %v1555 = vpop.f32.mrf.mxu0
          %v1556 = vadd.f32 0.0, %v1555
          %1557 = vmatmul.f32.gmra.mxu0 %v1491
          %v1558 = vpop.f32.mrf.mxu0
          %v1559 = vadd.f32 0.0, %v1558
          %1560 = vmatmul.f32.gmra.mxu0 %v1494
          %v1561 = vpop.f32.mrf.mxu0
          %v1562 = vadd.f32 0.0, %v1561
          %1563 = vmatmul.f32.gmra.mxu0 %v1497
          %v1564 = vpop.f32.mrf.mxu0
          %v1565 = vadd.f32 0.0, %v1564
          %1566 = vmatmul.f32.gmra.mxu0 %v1500
          %v1567 = vpop.f32.mrf.mxu0
          %v1568 = vadd.f32 0.0, %v1567
          %1569 = vmatmul.f32.gmra.mxu0 %v1503
          %v1570 = vpop.f32.mrf.mxu0
          %v1571 = vadd.f32 0.0, %v1570
          %1572 = vmatmul.f32.gmra.mxu0 %v1506
          %v1573 = vpop.f32.mrf.mxu0
          %v1574 = vadd.f32 0.0, %v1573
          %1575 = vmatmul.f32.gmra.mxu0 %v1509
          %v1576 = vpop.f32.mrf.mxu0
          %v1577 = vadd.f32 0.0, %v1576
          %1578 = vmatmul.f32.gmra.mxu0 %v1512
          %v1579 = vpop.f32.mrf.mxu0
          %v1580 = vadd.f32 0.0, %v1579
          %1581 = vmatmul.f32.gmra.mxu0 %v1515
          %v1582 = vpop.f32.mrf.mxu0
          %v1583 = vadd.f32 0.0, %v1582
          %1584 = vdwg.mxu0
          %v1585 = vld [vmem:[#allocation4] sm:$0xff]
          %v1586 = vld [vmem:[#allocation4 + $0x8] sm:$0xff]
          %v1587 = vld [vmem:[#allocation4 + $0x10] sm:$0xff]
          %v1588 = vld [vmem:[#allocation4 + $0x18] sm:$0xff]
          %v1589 = vld [vmem:[#allocation4 + $0x20] sm:$0xff]
          %v1590 = vld [vmem:[#allocation4 + $0x28] sm:$0xff]
          %v1591 = vld [vmem:[#allocation4 + $0x30] sm:$0xff]
          %v1592 = vld [vmem:[#allocation4 + $0x38] sm:$0xff]
          %v1593 = vld [vmem:[#allocation4 + $0x40] sm:$0xff]
          %v1594 = vld [vmem:[#allocation4 + $0x48] sm:$0xff]
          %v1595 = vld [vmem:[#allocation4 + $0x50] sm:$0xff]
          %v1596 = vld [vmem:[#allocation4 + $0x58] sm:$0xff]
          %v1597 = vld [vmem:[#allocation4 + $0x60] sm:$0xff]
          %v1598 = vld [vmem:[#allocation4 + $0x68] sm:$0xff]
          %v1599 = vld [vmem:[#allocation4 + $0x70] sm:$0xff]
          %v1600 = vld [vmem:[#allocation4 + $0x78] sm:$0xff]
          %v1601 = vmul.f32 %v1585, %v1390
          %v1602 = vmul.f32 %v1586, %v1393
          %v1603 = vmul.f32 %v1587, %v1396
          %v1604 = vmul.f32 %v1588, %v1399
          %v1605 = vmul.f32 %v1589, %v1402
          %v1606 = vmul.f32 %v1590, %v1405
          %v1607 = vmul.f32 %v1591, %v1408
          %v1608 = vmul.f32 %v1592, %v1411
          %v1609 = vmul.f32 %v1593, %v1414
          %v1610 = vmul.f32 %v1594, %v1417
          %v1611 = vmul.f32 %v1595, %v1420
          %v1612 = vmul.f32 %v1596, %v1423
          %v1613 = vmul.f32 %v1597, %v1426
          %v1614 = vmul.f32 %v1598, %v1429
          %v1615 = vmul.f32 %v1599, %v1432
          %v1616 = vmul.f32 %v1600, %v1435
          %v1617 = vsub.f32 %v1601, %v1538
          %v1618 = vsub.f32 %v1602, %v1541
          %v1619 = vsub.f32 %v1603, %v1544
          %v1620 = vsub.f32 %v1604, %v1547
          %v1621 = vsub.f32 %v1605, %v1550
          %v1622 = vsub.f32 %v1606, %v1553
          %v1623 = vsub.f32 %v1607, %v1556
          %v1624 = vsub.f32 %v1608, %v1559
          %v1625 = vsub.f32 %v1609, %v1562
          %v1626 = vsub.f32 %v1610, %v1565
          %v1627 = vsub.f32 %v1611, %v1568
          %v1628 = vsub.f32 %v1612, %v1571
          %v1629 = vsub.f32 %v1613, %v1574
          %v1630 = vsub.f32 %v1614, %v1577
          %v1631 = vsub.f32 %v1615, %v1580
          %v1632 = vsub.f32 %v1616, %v1583
          %v1633 = vmul.f32 %v1617, %v1617
          %v1634 = vmul.f32 %v1618, %v1618
          %v1635 = vmul.f32 %v1619, %v1619
          %v1636 = vmul.f32 %v1620, %v1620
          %v1637 = vmul.f32 %v1621, %v1621
          %v1638 = vmul.f32 %v1622, %v1622
          %v1639 = vmul.f32 %v1623, %v1623
          %v1640 = vmul.f32 %v1624, %v1624
          %v1641 = vmul.f32 %v1625, %v1625
          %v1642 = vmul.f32 %v1626, %v1626
          %v1643 = vmul.f32 %v1627, %v1627
          %v1644 = vmul.f32 %v1628, %v1628
          %v1645 = vmul.f32 %v1629, %v1629
          %v1646 = vmul.f32 %v1630, %v1630
          %v1647 = vmul.f32 %v1631, %v1631
          %v1648 = vmul.f32 %v1632, %v1632
          %v1649 = vadd.f32 %v1633, %v1634
          %v1650 = vadd.f32 %v1649, %v1635
          %v1651 = vadd.f32 %v1650, %v1636
          %v1652 = vadd.f32 %v1651, %v1637
          %v1653 = vadd.f32 %v1652, %v1638
          %v1654 = vadd.f32 %v1653, %v1639
          %v1655 = vadd.f32 %v1654, %v1640
          %v1656 = vadd.f32 %v1655, %v1641
          %v1657 = vadd.f32 %v1656, %v1642
          %v1658 = vadd.f32 %v1657, %v1643
          %v1659 = vadd.f32 %v1658, %v1644
          %v1660 = vadd.f32 %v1659, %v1645
          %v1661 = vadd.f32 %v1660, %v1646
          %v1662 = vadd.f32 %v1661, %v1647
          %v1663 = vadd.f32 %v1662, %v1648
          %1664 = vadd.xlane.f32.xlu0 %v1663
          %v1665 = vpop.xlane.xlu0 %1664
          %v1666 = vrot.slane %v1665, 4
          %v1667 = vadd.f32 %v1665, %v1666
          %v1668 = vrot.slane %v1667, 2
          %v1669 = vadd.f32 %v1667, %v1668
          %v1670 = vrot.slane %v1669, 1
          %v1671 = vadd.f32 %v1669, %v1670
          %s1672 = vtos %v1671
          %s1673 = smul.f32 %s894, 2.0
          %s1674 = ssub.f32 %s1672, %s1673
          %s1675 = sadd.f32 %s1674, 32.0
          %s1676 = sadd.f32 %s1285, %s1675
          %s1677 = smul.f32 %s1676, 0.5
          %s1678 = sadd.f32 %s868, %s1677
          %s1679 = scalar_lea.smem [#allocation15], 0
          %1680 = sst [smem:[%s1679]] %s1678
        $region44: #{tpu_custom_call.1} parent=27 // pred_fallthru
          _
        // Predicated region
        $region45: #{tpu_custom_call.1} parent=27 // pred_check
          %p1681 = pneg %p85
        $region46: #{tpu_custom_call.1} parent=27 // pred_check_branch
          %1683 = sbr.rel (%p1681) target = $region48
        $region47: #{tpu_custom_call.1} parent=27 // pred_region
          %1685 = vsyncadd [#allocation12], 0
          %s1687 = sshll.u32 %s2, 4
          %s1688 = int_to_ptr.hbm [resolvable:$true] %s1687
          %1690 = dma.smem_to_hbm [#allocation15], 16, %s1688, [#allocation12]
        $region48: #{tpu_custom_call.1} parent=27 // pred_fallthru
          _
        // Predicated region
        $region49: #{tpu_custom_call.1} parent=27 // pred_check
          %p1691 = pneg %p85
        $region50: #{tpu_custom_call.1} parent=27 // pred_check_branch
          %1693 = sbr.rel (%p1691) target = $region52
        $region51: #{tpu_custom_call.1} parent=27 // pred_region
          %1695 = dma.done [#allocation12], 16
        $region52: #{tpu_custom_call.1} parent=27 // pred_fallthru
          _
        %1696 = sfence
      $region28: #{tpu_custom_call.1} parent=5 // pred_fallthru
        _
      %p1697 = scmp.le.s32.totalorder 2, %s15
      // Predicated region
      $region53: #{tpu_custom_call.1} parent=5 // pred_check
        %p1698 = pneg %p1697
      $region54: #{tpu_custom_call.1} parent=5 // pred_check_branch
        %1700 = sbr.rel (%p1698) target = $region56
      $region55: #{tpu_custom_call.1} parent=5 // pred_region
        %s1701 = ssub.s32 %s15, 2
      $region56: #{tpu_custom_call.1} parent=5 // pred_fallthru
        _
    $region6: #{tpu_custom_call.1} parent=1 // loop_footer
      %s19 = sadd.s32 1, %s15
    $region7: #{tpu_custom_call.1} parent=1 // loop_footer_branch
      %14 = sbr.rel target = $region3
    $region8: #{tpu_custom_call.1} parent=1 // loop_exit
      _
    %1702 = vsyncpa [#allocation11], 1
    %s1703 = scalar_lea.sflag [#allocation11], 1
    %1704 = vsyncpa %s1703, 1
    %1705 = vsyncpa [#allocation14], 1
    %s1706 = scalar_lea.sflag [#allocation14], 1
    %1707 = vsyncpa %s1706, 1
    %1708 = vsyncpa [#allocation12], 1
    %s1709 = scalar_lea.sflag [#allocation12], 1
    %1710 = vsyncpa %s1709, 1

</llo_original>
